<compile_context>
chip_gen: v7x
topology: tpu7x:2x2x1
jax: 0.10.0
libtpu: 0.0.40
codegen_flags: <defaults>
</compile_context>

<pallas_src>
import jax
import jax.numpy as jnp
import numpy as np
from jax.experimental import pallas as pl
from jax.experimental.pallas import tpu as pltpu


def hete_attention_kernel(rel_ref, x_ref, wt_ref, wq_ref, u_ref, f_ref):
    rel = rel_ref[...]                                         # (TM, R, F, E)  stream dtype
    tm, r, fct, e = rel.shape

    # val = q_encoder(rel) = rel @ W.T ; wt_ref holds W.T so this is a plain NN dot
    # (big MXU LHS: tm*R*F rows).  f32 accumulation regardless of stream dtype.
    val = jnp.dot(
        rel.reshape(tm * r * fct, e), wt_ref[...],
        preferred_element_type=jnp.float32,
    ).reshape(tm, r, fct, e)

    # attention logits: f[m,r,fc] = sum_e tanh(val)[m,r,fc,e] * weight_q[r,e]   (f32 math)
    q = jnp.tanh(val)                                          # EUP
    wq = wq_ref[...].astype(jnp.float32)                       # (R, E)
    logits = jnp.sum(q * wq[None, :, None, :], axis=-1)        # (TM, R, F)  VALU + XLU

    # softmax over the facet axis (torch dim=3); reciprocal only on the reduced tensor.
    lmax = jnp.max(logits, axis=2, keepdims=True)
    lexp = jnp.exp(logits - lmax)
    denom = jnp.sum(lexp, axis=2, keepdims=True)               # (TM, R, 1)
    f = lexp * (1.0 / denom)                                   # (TM, R, F)

    # u = sum_r val * f + residual facet features, then L2-normalize over emb dim.
    x = x_ref[...].astype(jnp.float32)                         # (TM, F, E)
    u = jnp.sum(val * f[..., None], axis=1) + x                # (TM, F, E)
    norm = jnp.sqrt(jnp.sum(u * u, axis=-1, keepdims=True))    # (TM, F, 1)
    u = u * (1.0 / jnp.maximum(norm, 1e-12))                   # torch F.normalize(eps=1e-12)

    u_ref[...] = u.astype(u_ref.dtype)
    # lane-dense store of f: (TM, R, F) -> (TM, R*F) -> transpose -> (R*F, TM)
    f_ref[...] = jnp.transpose(f.reshape(tm, r * fct)).astype(f_ref.dtype)


def hete_attention(feature, relation_feature, w_linear, weight_q,
                   n_facet, n_relation, *, tile_m=256, stream_dtype=None,
                   vmem_limit_bytes=48 * 1024 * 1024):
    B, N, cur_dim = feature.shape
    F = n_facet
    E = cur_dim // n_facet
    R = n_relation
    M = B * N

    # Tile sizing: clamp for small problems (single grid step, block == full extent);
    # otherwise keep the tile a multiple of 128 so the lane-dense f block stays aligned.
    if M <= tile_m:
        tile_m = max(8, ((M + 7) // 8) * 8)
    else:
        assert tile_m % 128 == 0, "tile_m must be a multiple of 128 when M > tile_m"
    M_pad = ((M + tile_m - 1) // tile_m) * tile_m
    grid_m = M_pad // tile_m

    stream_dtype = feature.dtype if stream_dtype is None else jnp.dtype(stream_dtype)
    out_dtype = feature.dtype

    rel = relation_feature.reshape(M, R, F, E).astype(stream_dtype)
    x = feature.reshape(M, F, E).astype(stream_dtype)
    if M_pad != M:
        pad = M_pad - M
        rel = jnp.pad(rel, ((0, pad), (0, 0), (0, 0), (0, 0)))
        x = jnp.pad(x, ((0, pad), (0, 0), (0, 0)))

    # Pre-transpose the q_encoder weight once (paid once by XLA, not per grid step).
    wt = jnp.transpose(w_linear).astype(stream_dtype)          # (E_in, E_out)
    wq = weight_q.astype(jnp.float32)

    itm = jnp.dtype(stream_dtype).itemsize
    bytes_accessed = (M_pad * R * F * E * itm                  # rel stream
                      + M_pad * F * E * itm                    # x stream
                      + E * E * itm + R * E * 4                # weights (negligible)
                      + M_pad * F * E * jnp.dtype(out_dtype).itemsize
                      + R * F * M_pad * 4)
    cost = pl.CostEstimate(
        flops=2 * M_pad * R * F * E * E + 8 * M_pad * R * F * E,
        transcendentals=M_pad * R * F * (E + 1),               # tanh + exp
        bytes_accessed=int(bytes_accessed),
    )

    u, f_t = pl.pallas_call(
        hete_attention_kernel,
        out_shape=(
            jax.ShapeDtypeStruct((M_pad, F, E), out_dtype),
            jax.ShapeDtypeStruct((R * F, M_pad), jnp.float32),
        ),
        grid_spec=pltpu.PrefetchScalarGridSpec(
            num_scalar_prefetch=0,
            grid=(grid_m,),
            in_specs=[
                pl.BlockSpec((tile_m, R, F, E), lambda i: (i, 0, 0, 0)),
                pl.BlockSpec((tile_m, F, E), lambda i: (i, 0, 0)),
                pl.BlockSpec((E, E), lambda i: (0, 0)),        # constant block: no re-DMA per step
                pl.BlockSpec((R, E), lambda i: (0, 0)),
            ],
            out_specs=[
                pl.BlockSpec((tile_m, F, E), lambda i: (i, 0, 0)),
                pl.BlockSpec((R * F, tile_m), lambda i: (0, i)),   # lane-dense f
            ],
        ),
        compiler_params=pltpu.CompilerParams(
            dimension_semantics=("parallel",),
            vmem_limit_bytes=vmem_limit_bytes,
        ),
        cost_estimate=cost,
    )(rel, x, wt, wq)

    u = u[:M].reshape(B, N, F * E)
    f = jnp.transpose(f_t[:, :M].reshape(R, F, M), (2, 0, 1)).reshape(B, N, R, F)
    fs = [f[:, :, r, :] for r in range(R)]    # matches the torch split/squeeze(dim=2)
    return u, fs


def hete_attention_ref(feature, relation_feature, w_linear, weight_q,
                       n_facet, n_relation):
    """Pure-JAX reference mirroring the PyTorch forward."""
    B, N, cur_dim = feature.shape
    E = cur_dim // n_facet
    rel = relation_feature.reshape(B, N, n_relation, n_facet, E)
    x = feature.reshape(B, N, n_facet, E)
    val = jnp.einsum('bnrfe,de->bnrfd', rel, w_linear)
    q = jnp.tanh(val)
    f = jnp.sum(q * weight_q[None, None, :, None, :], axis=4)
    f = jax.nn.softmax(f, axis=3)
    u = jnp.sum(val * f[..., None], axis=2) + x
    norm = jnp.sqrt(jnp.sum(u * u, axis=3, keepdims=True))
    u = u / jnp.maximum(norm, 1e-12)
    fs = [f[:, :, r, :] for r in range(n_relation)]
    return u.reshape(B, N, n_facet * E), fs


if __name__ == "__main__":
    B, N = 2, 8                  # batch_size, n_with_neg
    n_facet, n_relation = 8, 2
    emb_dim = 128
    cur_dim = n_facet * emb_dim  # 1024

    key = jax.random.PRNGKey(0)
    k1, k2, k3, k4 = jax.random.split(key, 4)
    # deterministic synthetic parameters (shapes per the module __init__)
    w_linear = jax.random.normal(k1, (emb_dim, emb_dim), jnp.float32) / jnp.sqrt(emb_dim)
    weight_q = jax.random.normal(k2, (n_relation, emb_dim), jnp.float32)
    feature = jax.random.normal(k3, (B, N, cur_dim), jnp.float32)
    relation_feature = jax.random.normal(k4, (B, N, n_relation * cur_dim), jnp.float32)

    # f32 streaming path (exact check against the reference)
    u, fs = hete_attention(feature, relation_feature, w_linear, weight_q,
                           n_facet, n_relation)
    u = jax.block_until_ready(u)
    fs = [jax.block_until_ready(fi) for fi in fs]

    u_ref, fs_ref = hete_attention_ref(feature, relation_feature, w_linear,
                                       weight_q, n_facet, n_relation)
    np.testing.assert_allclose(np.asarray(u), np.asarray(u_ref),
                               rtol=2e-4, atol=2e-4)
    for a, b in zip(fs, fs_ref):
        np.testing.assert_allclose(np.asarray(a), np.asarray(b),
                                   rtol=2e-4, atol=2e-4)

    # bf16 HBM-streaming path (halves memory traffic in the mem-bound regime; f32 math inside).
    u_bf, fs_bf = hete_attention(feature, relation_feature, w_linear, weight_q,
                                 n_facet, n_relation, stream_dtype=jnp.bfloat16)
    u_bf = jax.block_until_ready(u_bf)
    assert bool(jnp.all(jnp.isfinite(u_bf)))
    np.testing.assert_allclose(np.asarray(u_bf, np.float32), np.asarray(u_ref),
                               rtol=0, atol=5e-2)

    print("KERNEL_OK")
</pallas_src>

<mosaic_0001>
module attributes {stable_mosaic.version = 11 : i64} {
  func.func @hete_attention_kernel(%arg0: i32, %arg1: memref<16x2x8x128xf32, #tpu.memory_space<vmem>>, %arg2: memref<16x8x128xf32, #tpu.memory_space<vmem>>, %arg3: memref<128x128xf32, #tpu.memory_space<vmem>>, %arg4: memref<2x128xf32, #tpu.memory_space<vmem>>, %arg5: memref<16x8x128xf32, #tpu.memory_space<vmem>>, %arg6: memref<16x16xf32, #tpu.memory_space<vmem>>) attributes {dimension_semantics = [#tpu.dimension_semantics<parallel>], iteration_bounds = array<i64: 1>, scalar_prefetch = 0 : i64, scratch_operands = 0 : i64, tpu.core_type = #tpu.core_type<tc>, window_params = [{transform_indices = @transform_0, window_bounds = array<i64: 16, 2, 8, 128>}, {transform_indices = @transform_1, window_bounds = array<i64: 16, 8, 128>}, {pipeline_mode = #tpu.pipeline_mode<synchronous>, transform_indices = @transform_2, window_bounds = array<i64: 128, 128>}, {pipeline_mode = #tpu.pipeline_mode<synchronous>, transform_indices = @transform_3, window_bounds = array<i64: 2, 128>}, {transform_indices = @transform_4, window_bounds = array<i64: 16, 8, 128>}, {transform_indices = @transform_5, window_bounds = array<i64: 16, 16>}]} {
    %c0 = arith.constant 0 : index
    %c0_0 = arith.constant 0 : index
    %c0_1 = arith.constant 0 : index
    %c0_2 = arith.constant 0 : index
    %0 = vector.load %arg1[%c0, %c0_0, %c0_1, %c0_2] : memref<16x2x8x128xf32, #tpu.memory_space<vmem>>, vector<16x2x8x128xf32>
    %1 = vector.shape_cast %0 : vector<16x2x8x128xf32> to vector<256x128xf32>
    %c0_3 = arith.constant 0 : index
    %c0_4 = arith.constant 0 : index
    %2 = vector.load %arg3[%c0_3, %c0_4] : memref<128x128xf32, #tpu.memory_space<vmem>>, vector<128x128xf32>
    %cst = arith.constant dense<0.000000e+00> : vector<256x128xf32>
    %3 = tpu.matmul %1, %2, %cst {dimension_numbers = #tpu.dot_dimension_numbers<[1], [0], [0], [1], [0, 0, 1, 1], [], []>} : vector<256x128xf32>, vector<128x128xf32>, vector<256x128xf32> -> vector<256x128xf32>
    %4 = vector.shape_cast %3 : vector<256x128xf32> to vector<16x2x8x128xf32>
    %5 = math.tanh %4 : vector<16x2x8x128xf32>
    %c0_5 = arith.constant 0 : index
    %c0_6 = arith.constant 0 : index
    %6 = vector.load %arg4[%c0_5, %c0_6] : memref<2x128xf32, #tpu.memory_space<vmem>>, vector<2x128xf32>
    %7 = vector.shape_cast %6 : vector<2x128xf32> to vector<1x2x1x128xf32>
    %8 = vector.broadcast %7 : vector<1x2x1x128xf32> to vector<16x2x8x128xf32>
    %9 = arith.mulf %5, %8 : vector<16x2x8x128xf32>
    %cst_7 = arith.constant dense<0.000000e+00> : vector<16x2x8xf32>
    %10 = vector.multi_reduction <add>, %9, %cst_7 [3] : vector<16x2x8x128xf32> to vector<16x2x8xf32>
    %cst_8 = arith.constant dense<0xFF800000> : vector<16x2xf32>
    %11 = vector.multi_reduction <maximumf>, %10, %cst_8 [2] : vector<16x2x8xf32> to vector<16x2xf32>
    %12 = vector.shape_cast %11 : vector<16x2xf32> to vector<16x2x1xf32>
    %13 = vector.broadcast %12 : vector<16x2x1xf32> to vector<16x2x8xf32>
    %14 = arith.subf %10, %13 : vector<16x2x8xf32>
    %15 = math.exp %14 : vector<16x2x8xf32>
    %cst_9 = arith.constant dense<0.000000e+00> : vector<16x2xf32>
    %16 = vector.multi_reduction <add>, %15, %cst_9 [2] : vector<16x2x8xf32> to vector<16x2xf32>
    %17 = vector.shape_cast %16 : vector<16x2xf32> to vector<16x2x1xf32>
    %cst_10 = arith.constant 1.000000e+00 : f32
    %18 = vector.broadcast %cst_10 : f32 to vector<16x2x1xf32>
    %19 = arith.divf %18, %17 : vector<16x2x1xf32>
    %20 = vector.broadcast %19 : vector<16x2x1xf32> to vector<16x2x8xf32>
    %21 = arith.mulf %15, %20 : vector<16x2x8xf32>
    %c0_11 = arith.constant 0 : index
    %c0_12 = arith.constant 0 : index
    %c0_13 = arith.constant 0 : index
    %22 = vector.load %arg2[%c0_11, %c0_12, %c0_13] : memref<16x8x128xf32, #tpu.memory_space<vmem>>, vector<16x8x128xf32>
    %23 = vector.shape_cast %21 : vector<16x2x8xf32> to vector<16x2x8x1xf32>
    %24 = vector.broadcast %23 : vector<16x2x8x1xf32> to vector<16x2x8x128xf32>
    %25 = arith.mulf %4, %24 : vector<16x2x8x128xf32>
    %cst_14 = arith.constant dense<0.000000e+00> : vector<16x8x128xf32>
    %26 = vector.multi_reduction <add>, %25, %cst_14 [1] : vector<16x2x8x128xf32> to vector<16x8x128xf32>
    %27 = arith.addf %26, %22 : vector<16x8x128xf32>
    %28 = arith.mulf %27, %27 : vector<16x8x128xf32>
    %cst_15 = arith.constant dense<0.000000e+00> : vector<16x8xf32>
    %29 = vector.multi_reduction <add>, %28, %cst_15 [2] : vector<16x8x128xf32> to vector<16x8xf32>
    %30 = vector.shape_cast %29 : vector<16x8xf32> to vector<16x8x1xf32>
    %31 = math.sqrt %30 : vector<16x8x1xf32>
    %cst_16 = arith.constant 9.99999996E-13 : f32
    %32 = vector.broadcast %cst_16 : f32 to vector<16x8x1xf32>
    %33 = arith.maximumf %31, %32 : vector<16x8x1xf32>
    %cst_17 = arith.constant 1.000000e+00 : f32
    %34 = vector.broadcast %cst_17 : f32 to vector<16x8x1xf32>
    %35 = arith.divf %34, %33 : vector<16x8x1xf32>
    %36 = vector.broadcast %35 : vector<16x8x1xf32> to vector<16x8x128xf32>
    %37 = arith.mulf %27, %36 : vector<16x8x128xf32>
    %c0_18 = arith.constant 0 : index
    %c0_19 = arith.constant 0 : index
    %c0_20 = arith.constant 0 : index
    %38 = vector.load %arg5[%c0_18, %c0_19, %c0_20] : memref<16x8x128xf32, #tpu.memory_space<vmem>>, vector<16x8x128xf32>
    tpu.vector_store %arg5[%c0_18, %c0_19, %c0_20], %37 {strides = array<i32>} : memref<16x8x128xf32, #tpu.memory_space<vmem>>, vector<16x8x128xf32>,
    %39 = vector.shape_cast %21 : vector<16x2x8xf32> to vector<16x16xf32>
    %40 = tpu.transpose %39, [1, 0] : vector<16x16xf32> -> vector<16x16xf32>
    %c0_21 = arith.constant 0 : index
    %c0_22 = arith.constant 0 : index
    %41 = vector.load %arg6[%c0_21, %c0_22] : memref<16x16xf32, #tpu.memory_space<vmem>>, vector<16x16xf32>
    tpu.vector_store %arg6[%c0_21, %c0_22], %40 {strides = array<i32>} : memref<16x16xf32, #tpu.memory_space<vmem>>, vector<16x16xf32>,
    return
  }
  func.func @transform_0(%arg0: i32) -> (i32, i32, i32, i32) {
    %c0_i32 = arith.constant 0 : i32
    %c0_i32_0 = arith.constant 0 : i32
    %c0_i32_1 = arith.constant 0 : i32
    %c0_i32_2 = arith.constant 0 : i32
    return %arg0, %c0_i32, %c0_i32_0, %c0_i32_1 : i32, i32, i32, i32
  }
  func.func @transform_1(%arg0: i32) -> (i32, i32, i32) {
    %c0_i32 = arith.constant 0 : i32
    %c0_i32_0 = arith.constant 0 : i32
    %c0_i32_1 = arith.constant 0 : i32
    return %arg0, %c0_i32, %c0_i32_0 : i32, i32, i32
  }
  func.func @transform_2(%arg0: i32) -> (i32, i32) {
    %c0_i32 = arith.constant 0 : i32
    %c0_i32_0 = arith.constant 0 : i32
    %c0_i32_1 = arith.constant 0 : i32
    return %c0_i32, %c0_i32_0 : i32, i32
  }
  func.func @transform_3(%arg0: i32) -> (i32, i32) {
    %c0_i32 = arith.constant 0 : i32
    %c0_i32_0 = arith.constant 0 : i32
    %c0_i32_1 = arith.constant 0 : i32
    return %c0_i32, %c0_i32_0 : i32, i32
  }
  func.func @transform_4(%arg0: i32) -> (i32, i32, i32) {
    %c0_i32 = arith.constant 0 : i32
    %c0_i32_0 = arith.constant 0 : i32
    %c0_i32_1 = arith.constant 0 : i32
    return %arg0, %c0_i32, %c0_i32_0 : i32, i32, i32
  }
  func.func @transform_5(%arg0: i32) -> (i32, i32) {
    %c0_i32 = arith.constant 0 : i32
    %c0_i32_0 = arith.constant 0 : i32
    return %c0_i32, %arg0 : i32, i32
  }
}

</mosaic_0001>

<llo_original>
// kernel: tpu_custom_call.1
$region0: #{tpu_custom_call.1}
  #allocation0 [shape = 'u32[]', space=smem, size = 0x4, offset = 0x4, fixed_abs, tag = 'smem constant byte address 0x4 - core index']
  #allocation1 [shape = 'u32[144,128]{1,0:T(1,128)}', space=vmem, size = 0x12000, scoped, tag = 'internal scratch']
  %s0 = inlined_call_operand.hbm [shape: f32[16,2,8,128], index: 0, kind: input, shape index: {}]
  %s1 = inlined_call_operand.hbm [shape: f32[16,8,128], index: 1, kind: input, shape index: {}]
  %s2 = inlined_call_operand.hbm [shape: f32[128,128], index: 2, kind: input, shape index: {}]
  %s3 = inlined_call_operand.vmem [shape: f32[2,128], index: 3, kind: input, shape index: {}]
  %s4 = inlined_call_operand.hbm [shape: f32[16,8,128], index: 4, kind: output, shape index: {0}]
  %s5 = inlined_call_operand.hbm [shape: f32[16,16], index: 5, kind: output, shape index: {1}]
  %6 = xla_tuple %s4, %s5
  %s7 = sld [smem:[#allocation0]]
  $region46: #{tpu_custom_call.1} parent=0
    _
  %s9 = ssub.s32 1, %s7
  %s10 = scalar_select 0, %s9, %s7
  $region1: #{tpu_custom_call.1} parent=0
    #allocation2 [shape = 'u8[131072]{0}', space=vmem, size = 0x20000, scoped, tag = 'input window, operand 0, single buffered']
    #allocation3 [shape = 's32[1]{0}', space=sflag, size = 0x4, scoped, tag = 'scoped memory for tpu_custom_call.1']
    #allocation4 [shape = 's32[1]{0}', space=sflag, size = 0x4, scoped, tag = 'scoped memory for tpu_custom_call.1']
    #allocation5 [shape = 'u8[65536]{0}', space=vmem, size = 0x10000, scoped, tag = 'input window, operand 1, single buffered']
    #allocation6 [shape = 's32[1]{0}', space=sflag, size = 0x4, scoped, tag = 'scoped memory for tpu_custom_call.1']
    #allocation7 [shape = 'u8[65536]{0}', space=vmem, size = 0x10000, scoped, tag = 'input window, operand 2, single buffered']
    #allocation8 [shape = 'u8[65536]{0}', space=vmem, size = 0x10000, scoped, tag = 'output window, operand 0, single buffered']
    #allocation9 [shape = 'u8[8192]{0}', space=vmem, size = 0x2000, scoped, tag = 'output window, operand 1, single buffered']
    #allocation10 [shape = 's32[1]{0}', space=sflag, size = 0x4, scoped, tag = 'scoped memory for tpu_custom_call.1']
    %11 = vsyncpa [#allocation3], 0
    %12 = vsyncpa [#allocation6], 0
    %13 = vsyncpa [#allocation4], 0
    %14 = vsyncpa [#allocation10], 0
    // Predicated region
    $region2: #{tpu_custom_call.1} parent=1 // pred_check
      _
    $region3: #{tpu_custom_call.1} parent=1 // pred_check_branch
      %16 = sbr.rel (0) target = $region5
    $region4: #{tpu_custom_call.1} parent=1 // pred_region
      %s18 = ssub.s32 4096, 4096
      %19 = vsyncadd [#allocation3], %s18
      %s20 = sshll.u32 [#allocation2], 4
      %s21 = int_to_ptr.vmem [resolvable:$true] %s20
      %26 = dma.hbm_to_vmem [thread:$0]  %s0, 4096, %s21, [#allocation3], 128, 128, 8
    $region5: #{tpu_custom_call.1} parent=1 // pred_fallthru
      _
    // Predicated region
    $region6: #{tpu_custom_call.1} parent=1 // pred_check
      _
    $region7: #{tpu_custom_call.1} parent=1 // pred_check_branch
      %28 = sbr.rel (0) target = $region9
    $region8: #{tpu_custom_call.1} parent=1 // pred_region
      %s30 = ssub.s32 2048, 2048
      %31 = vsyncadd [#allocation6], %s30
      %s32 = sshll.u32 [#allocation5], 4
      %s33 = int_to_ptr.vmem [resolvable:$true] %s32
      %38 = dma.hbm_to_vmem [thread:$0]  %s1, 2048, %s33, [#allocation6], 128, 128, 8
    $region9: #{tpu_custom_call.1} parent=1 // pred_fallthru
      _
    // Predicated region
    $region10: #{tpu_custom_call.1} parent=1 // pred_check
      _
    $region11: #{tpu_custom_call.1} parent=1 // pred_check_branch
      %40 = sbr.rel (0) target = $region13
    $region12: #{tpu_custom_call.1} parent=1 // pred_region
      %s42 = ssub.s32 2048, 2048
      %43 = vsyncadd [#allocation6], %s42
      %s44 = sshll.u32 [#allocation7], 4
      %s45 = int_to_ptr.vmem [resolvable:$true] %s44
      %50 = dma.hbm_to_vmem [thread:$0]  %s2, 2048, %s45, [#allocation6], 128, 128, 8
    $region13: #{tpu_custom_call.1} parent=1 // pred_fallthru
      _
    // Predicated region
    $region14: #{tpu_custom_call.1} parent=1 // pred_check
      _
    $region15: #{tpu_custom_call.1} parent=1 // pred_check_branch
      %52 = sbr.rel (0) target = $region17
    $region16: #{tpu_custom_call.1} parent=1 // pred_region
      _
    $region17: #{tpu_custom_call.1} parent=1 // pred_fallthru
      _
    // Predicated region
    $region18: #{tpu_custom_call.1} parent=1 // pred_check
      _
    $region19: #{tpu_custom_call.1} parent=1 // pred_check_branch
      %54 = sbr.rel (0) target = $region21
    $region20: #{tpu_custom_call.1} parent=1 // pred_region
      %55 = dma.done [#allocation3], 4096
    $region21: #{tpu_custom_call.1} parent=1 // pred_fallthru
      _
    // Predicated region
    $region22: #{tpu_custom_call.1} parent=1 // pred_check
      _
    $region23: #{tpu_custom_call.1} parent=1 // pred_check_branch
      %57 = sbr.rel (0) target = $region25
    $region24: #{tpu_custom_call.1} parent=1 // pred_region
      %58 = dma.done [#allocation6], 2048
    $region25: #{tpu_custom_call.1} parent=1 // pred_fallthru
      _
    // Predicated region
    $region26: #{tpu_custom_call.1} parent=1 // pred_check
      _
    $region27: #{tpu_custom_call.1} parent=1 // pred_check_branch
      %60 = sbr.rel (0) target = $region29
    $region28: #{tpu_custom_call.1} parent=1 // pred_region
      %61 = dma.done [#allocation6], 2048
    $region29: #{tpu_custom_call.1} parent=1 // pred_fallthru
      _
    %v62 = vld [vmem:[#allocation2] sm:$0xff]
    %v63 = vld [vmem:[#allocation2 + $0x8] sm:$0xff]
    %v64 = vld [vmem:[#allocation2 + $0x10] sm:$0xff]
    %v65 = vld [vmem:[#allocation2 + $0x18] sm:$0xff]
    %v66 = vld [vmem:[#allocation2 + $0x20] sm:$0xff]
    %v67 = vld [vmem:[#allocation2 + $0x28] sm:$0xff]
    %v68 = vld [vmem:[#allocation2 + $0x30] sm:$0xff]
    %v69 = vld [vmem:[#allocation2 + $0x38] sm:$0xff]
    %v70 = vld [vmem:[#allocation2 + $0x40] sm:$0xff]
    %v71 = vld [vmem:[#allocation2 + $0x48] sm:$0xff]
    %v72 = vld [vmem:[#allocation2 + $0x50] sm:$0xff]
    %v73 = vld [vmem:[#allocation2 + $0x58] sm:$0xff]
    %v74 = vld [vmem:[#allocation2 + $0x60] sm:$0xff]
    %v75 = vld [vmem:[#allocation2 + $0x68] sm:$0xff]
    %v76 = vld [vmem:[#allocation2 + $0x70] sm:$0xff]
    %v77 = vld [vmem:[#allocation2 + $0x78] sm:$0xff]
    %v78 = vld [vmem:[#allocation2 + $0x80] sm:$0xff]
    %v79 = vld [vmem:[#allocation2 + $0x88] sm:$0xff]
    %v80 = vld [vmem:[#allocation2 + $0x90] sm:$0xff]
    %v81 = vld [vmem:[#allocation2 + $0x98] sm:$0xff]
    %v82 = vld [vmem:[#allocation2 + $0xa0] sm:$0xff]
    %v83 = vld [vmem:[#allocation2 + $0xa8] sm:$0xff]
    %v84 = vld [vmem:[#allocation2 + $0xb0] sm:$0xff]
    %v85 = vld [vmem:[#allocation2 + $0xb8] sm:$0xff]
    %v86 = vld [vmem:[#allocation2 + $0xc0] sm:$0xff]
    %v87 = vld [vmem:[#allocation2 + $0xc8] sm:$0xff]
    %v88 = vld [vmem:[#allocation2 + $0xd0] sm:$0xff]
    %v89 = vld [vmem:[#allocation2 + $0xd8] sm:$0xff]
    %v90 = vld [vmem:[#allocation2 + $0xe0] sm:$0xff]
    %v91 = vld [vmem:[#allocation2 + $0xe8] sm:$0xff]
    %v92 = vld [vmem:[#allocation2 + $0xf0] sm:$0xff]
    %v93 = vld [vmem:[#allocation2 + $0xf8] sm:$0xff]
    %v94 = vld [vmem:[#allocation7] sm:$0xff]
    %v95 = vld [vmem:[#allocation7 + $0x8] sm:$0xff]
    %v96 = vld [vmem:[#allocation7 + $0x10] sm:$0xff]
    %v97 = vld [vmem:[#allocation7 + $0x18] sm:$0xff]
    %v98 = vld [vmem:[#allocation7 + $0x20] sm:$0xff]
    %v99 = vld [vmem:[#allocation7 + $0x28] sm:$0xff]
    %v100 = vld [vmem:[#allocation7 + $0x30] sm:$0xff]
    %v101 = vld [vmem:[#allocation7 + $0x38] sm:$0xff]
    %v102 = vld [vmem:[#allocation7 + $0x40] sm:$0xff]
    %v103 = vld [vmem:[#allocation7 + $0x48] sm:$0xff]
    %v104 = vld [vmem:[#allocation7 + $0x50] sm:$0xff]
    %v105 = vld [vmem:[#allocation7 + $0x58] sm:$0xff]
    %v106 = vld [vmem:[#allocation7 + $0x60] sm:$0xff]
    %v107 = vld [vmem:[#allocation7 + $0x68] sm:$0xff]
    %v108 = vld [vmem:[#allocation7 + $0x70] sm:$0xff]
    %v109 = vld [vmem:[#allocation7 + $0x78] sm:$0xff]
    %110 = vmatprep.subr.mxu0 0.0
    %111 = vmatpush1.msra.mxu0 %v94
    %112 = vmatprep.subr.mxu0 0.0
    %113 = vmatpush1.msra.mxu0 %v95
    %114 = vmatprep.subr.mxu0 0.0
    %115 = vmatpush1.msra.mxu0 %v96
    %116 = vmatprep.subr.mxu0 0.0
    %117 = vmatpush1.msra.mxu0 %v97
    %118 = vmatprep.subr.mxu0 0.0
    %119 = vmatpush1.msra.mxu0 %v98
    %120 = vmatprep.subr.mxu0 0.0
    %121 = vmatpush1.msra.mxu0 %v99
    %122 = vmatprep.subr.mxu0 0.0
    %123 = vmatpush1.msra.mxu0 %v100
    %124 = vmatprep.subr.mxu0 0.0
    %125 = vmatpush1.msra.mxu0 %v101
    %126 = vmatprep.subr.mxu0 0.0
    %127 = vmatpush1.msra.mxu0 %v102
    %128 = vmatprep.subr.mxu0 0.0
    %129 = vmatpush1.msra.mxu0 %v103
    %130 = vmatprep.subr.mxu0 0.0
    %131 = vmatpush1.msra.mxu0 %v104
    %132 = vmatprep.subr.mxu0 0.0
    %133 = vmatpush1.msra.mxu0 %v105
    %134 = vmatprep.subr.mxu0 0.0
    %135 = vmatpush1.msra.mxu0 %v106
    %136 = vmatprep.subr.mxu0 0.0
    %137 = vmatpush1.msra.mxu0 %v107
    %138 = vmatprep.subr.mxu0 0.0
    %139 = vmatpush1.msra.mxu0 %v108
    %140 = vmatprep.subr.mxu0 0.0
    %141 = vmatpush1.msra.mxu0 %v109
    %142 = vmatprep.subr.mxu0 0.0
    %143 = vmatpush1.msra.mxu0 0.0
    %144 = vmatprep.subr.mxu0 0.0
    %145 = vmatpush1.msra.mxu0 0.0
    %146 = vmatprep.subr.mxu0 0.0
    %147 = vmatpush1.msra.mxu0 0.0
    %148 = vmatprep.subr.mxu0 0.0
    %149 = vmatpush1.msra.mxu0 0.0
    %150 = vmatprep.subr.mxu0 0.0
    %151 = vmatpush1.msra.mxu0 0.0
    %152 = vmatprep.subr.mxu0 0.0
    %153 = vmatpush1.msra.mxu0 0.0
    %154 = vmatprep.subr.mxu0 0.0
    %155 = vmatpush1.msra.mxu0 0.0
    %156 = vmatprep.subr.mxu0 0.0
    %157 = vmatpush1.msra.mxu0 0.0
    %158 = vmatprep.subr.mxu0 0.0
    %159 = vmatpush1.msra.mxu0 0.0
    %160 = vmatprep.subr.mxu0 0.0
    %161 = vmatpush1.msra.mxu0 0.0
    %162 = vmatprep.subr.mxu0 0.0
    %163 = vmatpush1.msra.mxu0 0.0
    %164 = vmatprep.subr.mxu0 0.0
    %165 = vmatpush1.msra.mxu0 0.0
    %166 = vmatprep.subr.mxu0 0.0
    %167 = vmatpush1.msra.mxu0 0.0
    %168 = vmatprep.subr.mxu0 0.0
    %169 = vmatpush1.msra.mxu0 0.0
    %170 = vmatprep.subr.mxu0 0.0
    %171 = vmatpush1.msra.mxu0 0.0
    %172 = vmatprep.subr.mxu0 0.0
    %173 = vmatpush1.msra.mxu0 0.0
    %174 = vmatprep.mubr.f32.mxu0 0.0
    %175 = vmatmul.mubr.f32.gmra.mrb[0].mxu0 %v62
    %v176 = vpop.f32.mrb[0].mxu0
    %v177 = vadd.f32 0.0, %v176
    %v178 = vpop.f32.mrb[0].mxu0
    %179 = vmatprep.mubr.f32.mxu0 0.0
    %180 = vmatmul.mubr.f32.gmra.mrb[0].mxu0 %v63
    %v181 = vpop.f32.mrb[0].mxu0
    %v182 = vadd.f32 0.0, %v181
    %v183 = vpop.f32.mrb[0].mxu0
    %184 = vmatprep.mubr.f32.mxu0 0.0
    %185 = vmatmul.mubr.f32.gmra.mrb[0].mxu0 %v64
    %v186 = vpop.f32.mrb[0].mxu0
    %v187 = vadd.f32 0.0, %v186
    %v188 = vpop.f32.mrb[0].mxu0
    %189 = vmatprep.mubr.f32.mxu0 0.0
    %190 = vmatmul.mubr.f32.gmra.mrb[0].mxu0 %v65
    %v191 = vpop.f32.mrb[0].mxu0
    %v192 = vadd.f32 0.0, %v191
    %v193 = vpop.f32.mrb[0].mxu0
    %194 = vmatprep.mubr.f32.mxu0 0.0
    %195 = vmatmul.mubr.f32.gmra.mrb[0].mxu0 %v66
    %v196 = vpop.f32.mrb[0].mxu0
    %v197 = vadd.f32 0.0, %v196
    %v198 = vpop.f32.mrb[0].mxu0
    %199 = vmatprep.mubr.f32.mxu0 0.0
    %200 = vmatmul.mubr.f32.gmra.mrb[0].mxu0 %v67
    %v201 = vpop.f32.mrb[0].mxu0
    %v202 = vadd.f32 0.0, %v201
    %v203 = vpop.f32.mrb[0].mxu0
    %204 = vmatprep.mubr.f32.mxu0 0.0
    %205 = vmatmul.mubr.f32.gmra.mrb[0].mxu0 %v68
    %v206 = vpop.f32.mrb[0].mxu0
    %v207 = vadd.f32 0.0, %v206
    %v208 = vpop.f32.mrb[0].mxu0
    %209 = vmatprep.mubr.f32.mxu0 0.0
    %210 = vmatmul.mubr.f32.gmra.mrb[0].mxu0 %v69
    %v211 = vpop.f32.mrb[0].mxu0
    %v212 = vadd.f32 0.0, %v211
    %v213 = vpop.f32.mrb[0].mxu0
    %214 = vmatprep.mubr.f32.mxu0 0.0
    %215 = vmatmul.mubr.f32.gmra.mrb[0].mxu0 %v70
    %v216 = vpop.f32.mrb[0].mxu0
    %v217 = vadd.f32 0.0, %v216
    %v218 = vpop.f32.mrb[0].mxu0
    %219 = vmatprep.mubr.f32.mxu0 0.0
    %220 = vmatmul.mubr.f32.gmra.mrb[0].mxu0 %v71
    %v221 = vpop.f32.mrb[0].mxu0
    %v222 = vadd.f32 0.0, %v221
    %v223 = vpop.f32.mrb[0].mxu0
    %224 = vmatprep.mubr.f32.mxu0 0.0
    %225 = vmatmul.mubr.f32.gmra.mrb[0].mxu0 %v72
    %v226 = vpop.f32.mrb[0].mxu0
    %v227 = vadd.f32 0.0, %v226
    %v228 = vpop.f32.mrb[0].mxu0
    %229 = vmatprep.mubr.f32.mxu0 0.0
    %230 = vmatmul.mubr.f32.gmra.mrb[0].mxu0 %v73
    %v231 = vpop.f32.mrb[0].mxu0
    %v232 = vadd.f32 0.0, %v231
    %v233 = vpop.f32.mrb[0].mxu0
    %234 = vmatprep.mubr.f32.mxu0 0.0
    %235 = vmatmul.mubr.f32.gmra.mrb[0].mxu0 %v74
    %v236 = vpop.f32.mrb[0].mxu0
    %v237 = vadd.f32 0.0, %v236
    %v238 = vpop.f32.mrb[0].mxu0
    %239 = vmatprep.mubr.f32.mxu0 0.0
    %240 = vmatmul.mubr.f32.gmra.mrb[0].mxu0 %v75
    %v241 = vpop.f32.mrb[0].mxu0
    %v242 = vadd.f32 0.0, %v241
    %v243 = vpop.f32.mrb[0].mxu0
    %244 = vmatprep.mubr.f32.mxu0 0.0
    %245 = vmatmul.mubr.f32.gmra.mrb[0].mxu0 %v76
    %v246 = vpop.f32.mrb[0].mxu0
    %v247 = vadd.f32 0.0, %v246
    %v248 = vpop.f32.mrb[0].mxu0
    %249 = vmatprep.mubr.f32.mxu0 0.0
    %250 = vmatmul.mubr.f32.gmra.mrb[0].mxu0 %v77
    %v251 = vpop.f32.mrb[0].mxu0
    %v252 = vadd.f32 0.0, %v251
    %v253 = vpop.f32.mrb[0].mxu0
    %254 = vmatprep.mubr.f32.mxu0 0.0
    %255 = vmatmul.mubr.f32.gmra.mrb[0].mxu0 %v78
    %v256 = vpop.f32.mrb[0].mxu0
    %v257 = vadd.f32 0.0, %v256
    %v258 = vpop.f32.mrb[0].mxu0
    %259 = vmatprep.mubr.f32.mxu0 0.0
    %260 = vmatmul.mubr.f32.gmra.mrb[0].mxu0 %v79
    %v261 = vpop.f32.mrb[0].mxu0
    %v262 = vadd.f32 0.0, %v261
    %v263 = vpop.f32.mrb[0].mxu0
    %264 = vmatprep.mubr.f32.mxu0 0.0
    %265 = vmatmul.mubr.f32.gmra.mrb[0].mxu0 %v80
    %v266 = vpop.f32.mrb[0].mxu0
    %v267 = vadd.f32 0.0, %v266
    %v268 = vpop.f32.mrb[0].mxu0
    %269 = vmatprep.mubr.f32.mxu0 0.0
    %270 = vmatmul.mubr.f32.gmra.mrb[0].mxu0 %v81
    %v271 = vpop.f32.mrb[0].mxu0
    %v272 = vadd.f32 0.0, %v271
    %v273 = vpop.f32.mrb[0].mxu0
    %274 = vmatprep.mubr.f32.mxu0 0.0
    %275 = vmatmul.mubr.f32.gmra.mrb[0].mxu0 %v82
    %v276 = vpop.f32.mrb[0].mxu0
    %v277 = vadd.f32 0.0, %v276
    %v278 = vpop.f32.mrb[0].mxu0
    %279 = vmatprep.mubr.f32.mxu0 0.0
    %280 = vmatmul.mubr.f32.gmra.mrb[0].mxu0 %v83
    %v281 = vpop.f32.mrb[0].mxu0
    %v282 = vadd.f32 0.0, %v281
    %v283 = vpop.f32.mrb[0].mxu0
    %284 = vmatprep.mubr.f32.mxu0 0.0
    %285 = vmatmul.mubr.f32.gmra.mrb[0].mxu0 %v84
    %v286 = vpop.f32.mrb[0].mxu0
    %v287 = vadd.f32 0.0, %v286
    %v288 = vpop.f32.mrb[0].mxu0
    %289 = vmatprep.mubr.f32.mxu0 0.0
    %290 = vmatmul.mubr.f32.gmra.mrb[0].mxu0 %v85
    %v291 = vpop.f32.mrb[0].mxu0
    %v292 = vadd.f32 0.0, %v291
    %v293 = vpop.f32.mrb[0].mxu0
    %294 = vmatprep.mubr.f32.mxu0 0.0
    %295 = vmatmul.mubr.f32.gmra.mrb[0].mxu0 %v86
    %v296 = vpop.f32.mrb[0].mxu0
    %v297 = vadd.f32 0.0, %v296
    %v298 = vpop.f32.mrb[0].mxu0
    %299 = vmatprep.mubr.f32.mxu0 0.0
    %300 = vmatmul.mubr.f32.gmra.mrb[0].mxu0 %v87
    %v301 = vpop.f32.mrb[0].mxu0
    %v302 = vadd.f32 0.0, %v301
    %v303 = vpop.f32.mrb[0].mxu0
    %304 = vmatprep.mubr.f32.mxu0 0.0
    %305 = vmatmul.mubr.f32.gmra.mrb[0].mxu0 %v88
    %v306 = vpop.f32.mrb[0].mxu0
    %v307 = vadd.f32 0.0, %v306
    %v308 = vpop.f32.mrb[0].mxu0
    %309 = vmatprep.mubr.f32.mxu0 0.0
    %310 = vmatmul.mubr.f32.gmra.mrb[0].mxu0 %v89
    %v311 = vpop.f32.mrb[0].mxu0
    %v312 = vadd.f32 0.0, %v311
    %v313 = vpop.f32.mrb[0].mxu0
    %314 = vmatprep.mubr.f32.mxu0 0.0
    %315 = vmatmul.mubr.f32.gmra.mrb[0].mxu0 %v90
    %v316 = vpop.f32.mrb[0].mxu0
    %v317 = vadd.f32 0.0, %v316
    %v318 = vpop.f32.mrb[0].mxu0
    %319 = vmatprep.mubr.f32.mxu0 0.0
    %320 = vmatmul.mubr.f32.gmra.mrb[0].mxu0 %v91
    %v321 = vpop.f32.mrb[0].mxu0
    %v322 = vadd.f32 0.0, %v321
    %v323 = vpop.f32.mrb[0].mxu0
    %324 = vmatprep.mubr.f32.mxu0 0.0
    %325 = vmatmul.mubr.f32.gmra.mrb[0].mxu0 %v92
    %v326 = vpop.f32.mrb[0].mxu0
    %v327 = vadd.f32 0.0, %v326
    %v328 = vpop.f32.mrb[0].mxu0
    %329 = vmatprep.mubr.f32.mxu0 0.0
    %330 = vmatmul.mubr.f32.gmra.mrb[0].mxu0 %v93
    %v331 = vpop.f32.mrb[0].mxu0
    %v332 = vadd.f32 0.0, %v331
    %v333 = vpop.f32.mrb[0].mxu0
    %334 = vdwg.mxu0
    %v335 = vtanh.pop %v177
    %v336 = vtanh.pop %v182
    %v337 = vtanh.pop %v187
    %v338 = vtanh.pop %v192
    %v339 = vtanh.pop %v197
    %v340 = vtanh.pop %v202
    %v341 = vtanh.pop %v207
    %v342 = vtanh.pop %v212
    %v343 = vtanh.pop %v217
    %v344 = vtanh.pop %v222
    %v345 = vtanh.pop %v227
    %v346 = vtanh.pop %v232
    %v347 = vtanh.pop %v237
    %v348 = vtanh.pop %v242
    %v349 = vtanh.pop %v247
    %v350 = vtanh.pop %v252
    %v351 = vtanh.pop %v257
    %v352 = vtanh.pop %v262
    %v353 = vtanh.pop %v267
    %v354 = vtanh.pop %v272
    %v355 = vtanh.pop %v277
    %v356 = vtanh.pop %v282
    %v357 = vtanh.pop %v287
    %v358 = vtanh.pop %v292
    %v359 = vtanh.pop %v297
    %v360 = vtanh.pop %v302
    %v361 = vtanh.pop %v307
    %v362 = vtanh.pop %v312
    %v363 = vtanh.pop %v317
    %v364 = vtanh.pop %v322
    %v365 = vtanh.pop %v327
    %v366 = vtanh.pop %v332
    %v367 = vld [vmem:[%s3] sm:$0x3]
    %v370 = vunpack.c.l.s4 1966171168
    %v371 = vunpack.c.0.s8 %v370
    %v372 = vlaneseq
    %v373 = vshrl.u32 %v372, 7
    %v374 = vsub.s32 %v371, %v373
    %v375 = vrot.slane %v367, %v374
    %v376 = vcombine.high %v375, %v375
    %v378 = vunpack.c.l.s4 1966171168
    %v379 = vunpack.c.0.s8 %v378
    %v380 = vlaneseq
    %v381 = vshrl.u32 %v380, 7
    %v382 = vsub.s32 %v379, %v381
    %v383 = vrot.slane %v375, %v382
    %v385 = vunpack.c.l.s4 1966171168
    %v386 = vunpack.c.0.s8 %v385
    %v387 = vlaneseq
    %v388 = vshrl.u32 %v387, 7
    %v389 = vsub.s32 %v386, %v388
    %v390 = vrot.slane %v376, %v389
    %v391 = vlaneseq
    %v392 = vshrl.u32 %v391, 7
    %v393 = vsub.s32 0, %v392
    %v394 = vrot.slane %v383, %v393
    %v395 = vlaneseq
    %v396 = vshrl.u32 %v395, 7
    %v397 = vsub.s32 0, %v396
    %v398 = vrot.slane %v390, %v397
    %v401 = vmul.f32 %v335, %v394
    %v402 = vmul.f32 %v336, %v398
    %v403 = vmul.f32 %v337, %v394
    %v404 = vmul.f32 %v338, %v398
    %v405 = vmul.f32 %v339, %v394
    %v406 = vmul.f32 %v340, %v398
    %v407 = vmul.f32 %v341, %v394
    %v408 = vmul.f32 %v342, %v398
    %v409 = vmul.f32 %v343, %v394
    %v410 = vmul.f32 %v344, %v398
    %v411 = vmul.f32 %v345, %v394
    %v412 = vmul.f32 %v346, %v398
    %v413 = vmul.f32 %v347, %v394
    %v414 = vmul.f32 %v348, %v398
    %v415 = vmul.f32 %v349, %v394
    %v416 = vmul.f32 %v350, %v398
    %v417 = vmul.f32 %v351, %v394
    %v418 = vmul.f32 %v352, %v398
    %v419 = vmul.f32 %v353, %v394
    %v420 = vmul.f32 %v354, %v398
    %v421 = vmul.f32 %v355, %v394
    %v422 = vmul.f32 %v356, %v398
    %v423 = vmul.f32 %v357, %v394
    %v424 = vmul.f32 %v358, %v398
    %v425 = vmul.f32 %v359, %v394
    %v426 = vmul.f32 %v360, %v398
    %v427 = vmul.f32 %v361, %v394
    %v428 = vmul.f32 %v362, %v398
    %v429 = vmul.f32 %v363, %v394
    %v430 = vmul.f32 %v364, %v398
    %v431 = vmul.f32 %v365, %v394
    %v432 = vmul.f32 %v366, %v398
    %433 = vadd.xlane.f32.xlu0 %v401
    %v434 = vpop.xlane.xlu0 %433
    %435 = vadd.xlane.f32.xlu0 %v402
    %v436 = vpop.xlane.xlu0 %435
    %437 = vadd.xlane.f32.xlu0 %v403
    %v438 = vpop.xlane.xlu0 %437
    %439 = vadd.xlane.f32.xlu0 %v404
    %v440 = vpop.xlane.xlu0 %439
    %441 = vadd.xlane.f32.xlu0 %v405
    %v442 = vpop.xlane.xlu0 %441
    %443 = vadd.xlane.f32.xlu0 %v406
    %v444 = vpop.xlane.xlu0 %443
    %445 = vadd.xlane.f32.xlu0 %v407
    %v446 = vpop.xlane.xlu0 %445
    %447 = vadd.xlane.f32.xlu0 %v408
    %v448 = vpop.xlane.xlu0 %447
    %449 = vadd.xlane.f32.xlu0 %v409
    %v450 = vpop.xlane.xlu0 %449
    %451 = vadd.xlane.f32.xlu0 %v410
    %v452 = vpop.xlane.xlu0 %451
    %453 = vadd.xlane.f32.xlu0 %v411
    %v454 = vpop.xlane.xlu0 %453
    %455 = vadd.xlane.f32.xlu0 %v412
    %v456 = vpop.xlane.xlu0 %455
    %457 = vadd.xlane.f32.xlu0 %v413
    %v458 = vpop.xlane.xlu0 %457
    %459 = vadd.xlane.f32.xlu0 %v414
    %v460 = vpop.xlane.xlu0 %459
    %461 = vadd.xlane.f32.xlu0 %v415
    %v462 = vpop.xlane.xlu0 %461
    %463 = vadd.xlane.f32.xlu0 %v416
    %v464 = vpop.xlane.xlu0 %463
    %465 = vadd.xlane.f32.xlu0 %v417
    %v466 = vpop.xlane.xlu0 %465
    %467 = vadd.xlane.f32.xlu0 %v418
    %v468 = vpop.xlane.xlu0 %467
    %469 = vadd.xlane.f32.xlu0 %v419
    %v470 = vpop.xlane.xlu0 %469
    %471 = vadd.xlane.f32.xlu0 %v420
    %v472 = vpop.xlane.xlu0 %471
    %473 = vadd.xlane.f32.xlu0 %v421
    %v474 = vpop.xlane.xlu0 %473
    %475 = vadd.xlane.f32.xlu0 %v422
    %v476 = vpop.xlane.xlu0 %475
    %477 = vadd.xlane.f32.xlu0 %v423
    %v478 = vpop.xlane.xlu0 %477
    %479 = vadd.xlane.f32.xlu0 %v424
    %v480 = vpop.xlane.xlu0 %479
    %481 = vadd.xlane.f32.xlu0 %v425
    %v482 = vpop.xlane.xlu0 %481
    %483 = vadd.xlane.f32.xlu0 %v426
    %v484 = vpop.xlane.xlu0 %483
    %485 = vadd.xlane.f32.xlu0 %v427
    %v486 = vpop.xlane.xlu0 %485
    %487 = vadd.xlane.f32.xlu0 %v428
    %v488 = vpop.xlane.xlu0 %487
    %489 = vadd.xlane.f32.xlu0 %v429
    %v490 = vpop.xlane.xlu0 %489
    %491 = vadd.xlane.f32.xlu0 %v430
    %v492 = vpop.xlane.xlu0 %491
    %493 = vadd.xlane.f32.xlu0 %v431
    %v494 = vpop.xlane.xlu0 %493
    %495 = vadd.xlane.f32.xlu0 %v432
    %v496 = vpop.xlane.xlu0 %495
    %v529 = vlaneseq
    %v530 = vand.u32 %v529, 127
    %v531 = vlaneseq
    %v532 = vshrl.u32 %v531, 7
    %v533 = vsub.s32 %v530, %v532
    %v534 = vrot.slane %v434, %v533
    %v535 = vlaneseq
    %v536 = vshrl.u32 %v535, 7
    %v537 = vsub.s32 %v530, %v536
    %v538 = vrot.slane %v436, %v537
    %v539 = vlaneseq
    %v540 = vshrl.u32 %v539, 7
    %v541 = vsub.s32 %v530, %v540
    %v542 = vrot.slane %v438, %v541
    %v543 = vlaneseq
    %v544 = vshrl.u32 %v543, 7
    %v545 = vsub.s32 %v530, %v544
    %v546 = vrot.slane %v440, %v545
    %v547 = vlaneseq
    %v548 = vshrl.u32 %v547, 7
    %v549 = vsub.s32 %v530, %v548
    %v550 = vrot.slane %v442, %v549
    %v551 = vlaneseq
    %v552 = vshrl.u32 %v551, 7
    %v553 = vsub.s32 %v530, %v552
    %v554 = vrot.slane %v444, %v553
    %v555 = vlaneseq
    %v556 = vshrl.u32 %v555, 7
    %v557 = vsub.s32 %v530, %v556
    %v558 = vrot.slane %v446, %v557
    %v559 = vlaneseq
    %v560 = vshrl.u32 %v559, 7
    %v561 = vsub.s32 %v530, %v560
    %v562 = vrot.slane %v448, %v561
    %v563 = vlaneseq
    %v564 = vshrl.u32 %v563, 7
    %v565 = vsub.s32 %v530, %v564
    %v566 = vrot.slane %v450, %v565
    %v567 = vlaneseq
    %v568 = vshrl.u32 %v567, 7
    %v569 = vsub.s32 %v530, %v568
    %v570 = vrot.slane %v452, %v569
    %v571 = vlaneseq
    %v572 = vshrl.u32 %v571, 7
    %v573 = vsub.s32 %v530, %v572
    %v574 = vrot.slane %v454, %v573
    %v575 = vlaneseq
    %v576 = vshrl.u32 %v575, 7
    %v577 = vsub.s32 %v530, %v576
    %v578 = vrot.slane %v456, %v577
    %v579 = vlaneseq
    %v580 = vshrl.u32 %v579, 7
    %v581 = vsub.s32 %v530, %v580
    %v582 = vrot.slane %v458, %v581
    %v583 = vlaneseq
    %v584 = vshrl.u32 %v583, 7
    %v585 = vsub.s32 %v530, %v584
    %v586 = vrot.slane %v460, %v585
    %v587 = vlaneseq
    %v588 = vshrl.u32 %v587, 7
    %v589 = vsub.s32 %v530, %v588
    %v590 = vrot.slane %v462, %v589
    %v591 = vlaneseq
    %v592 = vshrl.u32 %v591, 7
    %v593 = vsub.s32 %v530, %v592
    %v594 = vrot.slane %v464, %v593
    %v595 = vlaneseq
    %v596 = vshrl.u32 %v595, 7
    %v597 = vsub.s32 %v530, %v596
    %v598 = vrot.slane %v466, %v597
    %v599 = vlaneseq
    %v600 = vshrl.u32 %v599, 7
    %v601 = vsub.s32 %v530, %v600
    %v602 = vrot.slane %v468, %v601
    %v603 = vlaneseq
    %v604 = vshrl.u32 %v603, 7
    %v605 = vsub.s32 %v530, %v604
    %v606 = vrot.slane %v470, %v605
    %v607 = vlaneseq
    %v608 = vshrl.u32 %v607, 7
    %v609 = vsub.s32 %v530, %v608
    %v610 = vrot.slane %v472, %v609
    %v611 = vlaneseq
    %v612 = vshrl.u32 %v611, 7
    %v613 = vsub.s32 %v530, %v612
    %v614 = vrot.slane %v474, %v613
    %v615 = vlaneseq
    %v616 = vshrl.u32 %v615, 7
    %v617 = vsub.s32 %v530, %v616
    %v618 = vrot.slane %v476, %v617
    %v619 = vlaneseq
    %v620 = vshrl.u32 %v619, 7
    %v621 = vsub.s32 %v530, %v620
    %v622 = vrot.slane %v478, %v621
    %v623 = vlaneseq
    %v624 = vshrl.u32 %v623, 7
    %v625 = vsub.s32 %v530, %v624
    %v626 = vrot.slane %v480, %v625
    %v627 = vlaneseq
    %v628 = vshrl.u32 %v627, 7
    %v629 = vsub.s32 %v530, %v628
    %v630 = vrot.slane %v482, %v629
    %v631 = vlaneseq
    %v632 = vshrl.u32 %v631, 7
    %v633 = vsub.s32 %v530, %v632
    %v634 = vrot.slane %v484, %v633
    %v635 = vlaneseq
    %v636 = vshrl.u32 %v635, 7
    %v637 = vsub.s32 %v530, %v636
    %v638 = vrot.slane %v486, %v637
    %v639 = vlaneseq
    %v640 = vshrl.u32 %v639, 7
    %v641 = vsub.s32 %v530, %v640
    %v642 = vrot.slane %v488, %v641
    %v643 = vlaneseq
    %v644 = vshrl.u32 %v643, 7
    %v645 = vsub.s32 %v530, %v644
    %v646 = vrot.slane %v490, %v645
    %v647 = vlaneseq
    %v648 = vshrl.u32 %v647, 7
    %v649 = vsub.s32 %v530, %v648
    %v650 = vrot.slane %v492, %v649
    %v651 = vlaneseq
    %v652 = vshrl.u32 %v651, 7
    %v653 = vsub.s32 %v530, %v652
    %v654 = vrot.slane %v494, %v653
    %v655 = vlaneseq
    %v656 = vshrl.u32 %v655, 7
    %v657 = vsub.s32 %v530, %v656
    %v658 = vrot.slane %v496, %v657
    %vm659 = vcmask 1041409
    %v660 = vsel %vm659, %v538, %v534
    %v661 = vsel %vm659, %v546, %v542
    %v662 = vsel %vm659, %v554, %v550
    %v663 = vsel %vm659, %v562, %v558
    %v664 = vsel %vm659, %v570, %v566
    %v665 = vsel %vm659, %v578, %v574
    %v666 = vsel %vm659, %v586, %v582
    %v667 = vsel %vm659, %v594, %v590
    %v668 = vsel %vm659, %v602, %v598
    %v669 = vsel %vm659, %v610, %v606
    %v670 = vsel %vm659, %v618, %v614
    %v671 = vsel %vm659, %v626, %v622
    %v672 = vsel %vm659, %v634, %v630
    %v673 = vsel %vm659, %v642, %v638
    %v674 = vsel %vm659, %v650, %v646
    %v675 = vsel %vm659, %v658, %v654
    %vm692 = vcmask 58368
    %v693 = vsel %vm692, %v660, -inf
    %694 = vmax.xlane.f32.xlu0 %v693
    %v695 = vpop.xlane.xlu0 %694
    %v696 = vsel %vm692, %v661, -inf
    %697 = vmax.xlane.f32.xlu0 %v696
    %v698 = vpop.xlane.xlu0 %697
    %v699 = vsel %vm692, %v662, -inf
    %700 = vmax.xlane.f32.xlu0 %v699
    %v701 = vpop.xlane.xlu0 %700
    %v702 = vsel %vm692, %v663, -inf
    %703 = vmax.xlane.f32.xlu0 %v702
    %v704 = vpop.xlane.xlu0 %703
    %v705 = vsel %vm692, %v664, -inf
    %706 = vmax.xlane.f32.xlu0 %v705
    %v707 = vpop.xlane.xlu0 %706
    %v708 = vsel %vm692, %v665, -inf
    %709 = vmax.xlane.f32.xlu0 %v708
    %v710 = vpop.xlane.xlu0 %709
    %v711 = vsel %vm692, %v666, -inf
    %712 = vmax.xlane.f32.xlu0 %v711
    %v713 = vpop.xlane.xlu0 %712
    %v714 = vsel %vm692, %v667, -inf
    %715 = vmax.xlane.f32.xlu0 %v714
    %v716 = vpop.xlane.xlu0 %715
    %v717 = vsel %vm692, %v668, -inf
    %718 = vmax.xlane.f32.xlu0 %v717
    %v719 = vpop.xlane.xlu0 %718
    %v720 = vsel %vm692, %v669, -inf
    %721 = vmax.xlane.f32.xlu0 %v720
    %v722 = vpop.xlane.xlu0 %721
    %v723 = vsel %vm692, %v670, -inf
    %724 = vmax.xlane.f32.xlu0 %v723
    %v725 = vpop.xlane.xlu0 %724
    %v726 = vsel %vm692, %v671, -inf
    %727 = vmax.xlane.f32.xlu0 %v726
    %v728 = vpop.xlane.xlu0 %727
    %v729 = vsel %vm692, %v672, -inf
    %730 = vmax.xlane.f32.xlu0 %v729
    %v731 = vpop.xlane.xlu0 %730
    %v732 = vsel %vm692, %v673, -inf
    %733 = vmax.xlane.f32.xlu0 %v732
    %v734 = vpop.xlane.xlu0 %733
    %v735 = vsel %vm692, %v674, -inf
    %736 = vmax.xlane.f32.xlu0 %v735
    %v737 = vpop.xlane.xlu0 %736
    %v738 = vsel %vm692, %v675, -inf
    %739 = vmax.xlane.f32.xlu0 %v738
    %v740 = vpop.xlane.xlu0 %739
    %v757 = vlaneseq
    %v758 = vshrl.u32 %v757, 7
    %v759 = vsub.s32 0, %v758
    %v760 = vrot.slane %v695, %v759
    %v761 = vlaneseq
    %v762 = vshrl.u32 %v761, 7
    %v763 = vsub.s32 1, %v762
    %v764 = vrot.slane %v695, %v763
    %v765 = vlaneseq
    %v766 = vshrl.u32 %v765, 7
    %v767 = vsub.s32 0, %v766
    %v768 = vrot.slane %v698, %v767
    %v769 = vlaneseq
    %v770 = vshrl.u32 %v769, 7
    %v771 = vsub.s32 1, %v770
    %v772 = vrot.slane %v698, %v771
    %v773 = vlaneseq
    %v774 = vshrl.u32 %v773, 7
    %v775 = vsub.s32 0, %v774
    %v776 = vrot.slane %v701, %v775
    %v777 = vlaneseq
    %v778 = vshrl.u32 %v777, 7
    %v779 = vsub.s32 1, %v778
    %v780 = vrot.slane %v701, %v779
    %v781 = vlaneseq
    %v782 = vshrl.u32 %v781, 7
    %v783 = vsub.s32 0, %v782
    %v784 = vrot.slane %v704, %v783
    %v785 = vlaneseq
    %v786 = vshrl.u32 %v785, 7
    %v787 = vsub.s32 1, %v786
    %v788 = vrot.slane %v704, %v787
    %v789 = vlaneseq
    %v790 = vshrl.u32 %v789, 7
    %v791 = vsub.s32 0, %v790
    %v792 = vrot.slane %v707, %v791
    %v793 = vlaneseq
    %v794 = vshrl.u32 %v793, 7
    %v795 = vsub.s32 1, %v794
    %v796 = vrot.slane %v707, %v795
    %v797 = vlaneseq
    %v798 = vshrl.u32 %v797, 7
    %v799 = vsub.s32 0, %v798
    %v800 = vrot.slane %v710, %v799
    %v801 = vlaneseq
    %v802 = vshrl.u32 %v801, 7
    %v803 = vsub.s32 1, %v802
    %v804 = vrot.slane %v710, %v803
    %v805 = vlaneseq
    %v806 = vshrl.u32 %v805, 7
    %v807 = vsub.s32 0, %v806
    %v808 = vrot.slane %v713, %v807
    %v809 = vlaneseq
    %v810 = vshrl.u32 %v809, 7
    %v811 = vsub.s32 1, %v810
    %v812 = vrot.slane %v713, %v811
    %v813 = vlaneseq
    %v814 = vshrl.u32 %v813, 7
    %v815 = vsub.s32 0, %v814
    %v816 = vrot.slane %v716, %v815
    %v817 = vlaneseq
    %v818 = vshrl.u32 %v817, 7
    %v819 = vsub.s32 1, %v818
    %v820 = vrot.slane %v716, %v819
    %v821 = vlaneseq
    %v822 = vshrl.u32 %v821, 7
    %v823 = vsub.s32 0, %v822
    %v824 = vrot.slane %v719, %v823
    %v825 = vlaneseq
    %v826 = vshrl.u32 %v825, 7
    %v827 = vsub.s32 1, %v826
    %v828 = vrot.slane %v719, %v827
    %v829 = vlaneseq
    %v830 = vshrl.u32 %v829, 7
    %v831 = vsub.s32 0, %v830
    %v832 = vrot.slane %v722, %v831
    %v833 = vlaneseq
    %v834 = vshrl.u32 %v833, 7
    %v835 = vsub.s32 1, %v834
    %v836 = vrot.slane %v722, %v835
    %v837 = vlaneseq
    %v838 = vshrl.u32 %v837, 7
    %v839 = vsub.s32 0, %v838
    %v840 = vrot.slane %v725, %v839
    %v841 = vlaneseq
    %v842 = vshrl.u32 %v841, 7
    %v843 = vsub.s32 1, %v842
    %v844 = vrot.slane %v725, %v843
    %v845 = vlaneseq
    %v846 = vshrl.u32 %v845, 7
    %v847 = vsub.s32 0, %v846
    %v848 = vrot.slane %v728, %v847
    %v849 = vlaneseq
    %v850 = vshrl.u32 %v849, 7
    %v851 = vsub.s32 1, %v850
    %v852 = vrot.slane %v728, %v851
    %v853 = vlaneseq
    %v854 = vshrl.u32 %v853, 7
    %v855 = vsub.s32 0, %v854
    %v856 = vrot.slane %v731, %v855
    %v857 = vlaneseq
    %v858 = vshrl.u32 %v857, 7
    %v859 = vsub.s32 1, %v858
    %v860 = vrot.slane %v731, %v859
    %v861 = vlaneseq
    %v862 = vshrl.u32 %v861, 7
    %v863 = vsub.s32 0, %v862
    %v864 = vrot.slane %v734, %v863
    %v865 = vlaneseq
    %v866 = vshrl.u32 %v865, 7
    %v867 = vsub.s32 1, %v866
    %v868 = vrot.slane %v734, %v867
    %v869 = vlaneseq
    %v870 = vshrl.u32 %v869, 7
    %v871 = vsub.s32 0, %v870
    %v872 = vrot.slane %v737, %v871
    %v873 = vlaneseq
    %v874 = vshrl.u32 %v873, 7
    %v875 = vsub.s32 1, %v874
    %v876 = vrot.slane %v737, %v875
    %v877 = vlaneseq
    %v878 = vshrl.u32 %v877, 7
    %v879 = vsub.s32 0, %v878
    %v880 = vrot.slane %v740, %v879
    %v881 = vlaneseq
    %v882 = vshrl.u32 %v881, 7
    %v883 = vsub.s32 1, %v882
    %v884 = vrot.slane %v740, %v883
    %v917 = vsub.f32 %v434, %v760
    %v918 = vsub.f32 %v436, %v764
    %v919 = vsub.f32 %v438, %v768
    %v920 = vsub.f32 %v440, %v772
    %v921 = vsub.f32 %v442, %v776
    %v922 = vsub.f32 %v444, %v780
    %v923 = vsub.f32 %v446, %v784
    %v924 = vsub.f32 %v448, %v788
    %v925 = vsub.f32 %v450, %v792
    %v926 = vsub.f32 %v452, %v796
    %v927 = vsub.f32 %v454, %v800
    %v928 = vsub.f32 %v456, %v804
    %v929 = vsub.f32 %v458, %v808
    %v930 = vsub.f32 %v460, %v812
    %v931 = vsub.f32 %v462, %v816
    %v932 = vsub.f32 %v464, %v820
    %v933 = vsub.f32 %v466, %v824
    %v934 = vsub.f32 %v468, %v828
    %v935 = vsub.f32 %v470, %v832
    %v936 = vsub.f32 %v472, %v836
    %v937 = vsub.f32 %v474, %v840
    %v938 = vsub.f32 %v476, %v844
    %v939 = vsub.f32 %v478, %v848
    %v940 = vsub.f32 %v480, %v852
    %v941 = vsub.f32 %v482, %v856
    %v942 = vsub.f32 %v484, %v860
    %v943 = vsub.f32 %v486, %v864
    %v944 = vsub.f32 %v488, %v868
    %v945 = vsub.f32 %v490, %v872
    %v946 = vsub.f32 %v492, %v876
    %v947 = vsub.f32 %v494, %v880
    %v948 = vsub.f32 %v496, %v884
    %v949 = vmul.f32 %v917, 1.442695
    %v950 = vpow.pop %v949
    %v951 = vmul.f32 %v918, 1.442695
    %v952 = vpow.pop %v951
    %v953 = vmul.f32 %v919, 1.442695
    %v954 = vpow.pop %v953
    %v955 = vmul.f32 %v920, 1.442695
    %v956 = vpow.pop %v955
    %v957 = vmul.f32 %v921, 1.442695
    %v958 = vpow.pop %v957
    %v959 = vmul.f32 %v922, 1.442695
    %v960 = vpow.pop %v959
    %v961 = vmul.f32 %v923, 1.442695
    %v962 = vpow.pop %v961
    %v963 = vmul.f32 %v924, 1.442695
    %v964 = vpow.pop %v963
    %v965 = vmul.f32 %v925, 1.442695
    %v966 = vpow.pop %v965
    %v967 = vmul.f32 %v926, 1.442695
    %v968 = vpow.pop %v967
    %v969 = vmul.f32 %v927, 1.442695
    %v970 = vpow.pop %v969
    %v971 = vmul.f32 %v928, 1.442695
    %v972 = vpow.pop %v971
    %v973 = vmul.f32 %v929, 1.442695
    %v974 = vpow.pop %v973
    %v975 = vmul.f32 %v930, 1.442695
    %v976 = vpow.pop %v975
    %v977 = vmul.f32 %v931, 1.442695
    %v978 = vpow.pop %v977
    %v979 = vmul.f32 %v932, 1.442695
    %v980 = vpow.pop %v979
    %v981 = vmul.f32 %v933, 1.442695
    %v982 = vpow.pop %v981
    %v983 = vmul.f32 %v934, 1.442695
    %v984 = vpow.pop %v983
    %v985 = vmul.f32 %v935, 1.442695
    %v986 = vpow.pop %v985
    %v987 = vmul.f32 %v936, 1.442695
    %v988 = vpow.pop %v987
    %v989 = vmul.f32 %v937, 1.442695
    %v990 = vpow.pop %v989
    %v991 = vmul.f32 %v938, 1.442695
    %v992 = vpow.pop %v991
    %v993 = vmul.f32 %v939, 1.442695
    %v994 = vpow.pop %v993
    %v995 = vmul.f32 %v940, 1.442695
    %v996 = vpow.pop %v995
    %v997 = vmul.f32 %v941, 1.442695
    %v998 = vpow.pop %v997
    %v999 = vmul.f32 %v942, 1.442695
    %v1000 = vpow.pop %v999
    %v1001 = vmul.f32 %v943, 1.442695
    %v1002 = vpow.pop %v1001
    %v1003 = vmul.f32 %v944, 1.442695
    %v1004 = vpow.pop %v1003
    %v1005 = vmul.f32 %v945, 1.442695
    %v1006 = vpow.pop %v1005
    %v1007 = vmul.f32 %v946, 1.442695
    %v1008 = vpow.pop %v1007
    %v1009 = vmul.f32 %v947, 1.442695
    %v1010 = vpow.pop %v1009
    %v1011 = vmul.f32 %v948, 1.442695
    %v1012 = vpow.pop %v1011
    %1045 = vset.pattern.permute.xlu0 0
    %1046 = vperm.xlu0 %1045, %v950
    %v1047 = vpop.permute.xlu0 %1046
    %1048 = vset.pattern.permute.xlu0 0
    %1049 = vperm.xlu0 %1048, %v952
    %v1050 = vpop.permute.xlu0 %1049
    %1051 = vset.pattern.permute.xlu0 0
    %1052 = vperm.xlu0 %1051, %v954
    %v1053 = vpop.permute.xlu0 %1052
    %1054 = vset.pattern.permute.xlu0 0
    %1055 = vperm.xlu0 %1054, %v956
    %v1056 = vpop.permute.xlu0 %1055
    %1057 = vset.pattern.permute.xlu0 0
    %1058 = vperm.xlu0 %1057, %v958
    %v1059 = vpop.permute.xlu0 %1058
    %1060 = vset.pattern.permute.xlu0 0
    %1061 = vperm.xlu0 %1060, %v960
    %v1062 = vpop.permute.xlu0 %1061
    %1063 = vset.pattern.permute.xlu0 0
    %1064 = vperm.xlu0 %1063, %v962
    %v1065 = vpop.permute.xlu0 %1064
    %1066 = vset.pattern.permute.xlu0 0
    %1067 = vperm.xlu0 %1066, %v964
    %v1068 = vpop.permute.xlu0 %1067
    %1069 = vset.pattern.permute.xlu0 0
    %1070 = vperm.xlu0 %1069, %v966
    %v1071 = vpop.permute.xlu0 %1070
    %1072 = vset.pattern.permute.xlu0 0
    %1073 = vperm.xlu0 %1072, %v968
    %v1074 = vpop.permute.xlu0 %1073
    %1075 = vset.pattern.permute.xlu0 0
    %1076 = vperm.xlu0 %1075, %v970
    %v1077 = vpop.permute.xlu0 %1076
    %1078 = vset.pattern.permute.xlu0 0
    %1079 = vperm.xlu0 %1078, %v972
    %v1080 = vpop.permute.xlu0 %1079
    %1081 = vset.pattern.permute.xlu0 0
    %1082 = vperm.xlu0 %1081, %v974
    %v1083 = vpop.permute.xlu0 %1082
    %1084 = vset.pattern.permute.xlu0 0
    %1085 = vperm.xlu0 %1084, %v976
    %v1086 = vpop.permute.xlu0 %1085
    %1087 = vset.pattern.permute.xlu0 0
    %1088 = vperm.xlu0 %1087, %v978
    %v1089 = vpop.permute.xlu0 %1088
    %1090 = vset.pattern.permute.xlu0 0
    %1091 = vperm.xlu0 %1090, %v980
    %v1092 = vpop.permute.xlu0 %1091
    %1093 = vset.pattern.permute.xlu0 0
    %1094 = vperm.xlu0 %1093, %v982
    %v1095 = vpop.permute.xlu0 %1094
    %1096 = vset.pattern.permute.xlu0 0
    %1097 = vperm.xlu0 %1096, %v984
    %v1098 = vpop.permute.xlu0 %1097
    %1099 = vset.pattern.permute.xlu0 0
    %1100 = vperm.xlu0 %1099, %v986
    %v1101 = vpop.permute.xlu0 %1100
    %1102 = vset.pattern.permute.xlu0 0
    %1103 = vperm.xlu0 %1102, %v988
    %v1104 = vpop.permute.xlu0 %1103
    %1105 = vset.pattern.permute.xlu0 0
    %1106 = vperm.xlu0 %1105, %v990
    %v1107 = vpop.permute.xlu0 %1106
    %1108 = vset.pattern.permute.xlu0 0
    %1109 = vperm.xlu0 %1108, %v992
    %v1110 = vpop.permute.xlu0 %1109
    %1111 = vset.pattern.permute.xlu0 0
    %1112 = vperm.xlu0 %1111, %v994
    %v1113 = vpop.permute.xlu0 %1112
    %1114 = vset.pattern.permute.xlu0 0
    %1115 = vperm.xlu0 %1114, %v996
    %v1116 = vpop.permute.xlu0 %1115
    %1117 = vset.pattern.permute.xlu0 0
    %1118 = vperm.xlu0 %1117, %v998
    %v1119 = vpop.permute.xlu0 %1118
    %1120 = vset.pattern.permute.xlu0 0
    %1121 = vperm.xlu0 %1120, %v1000
    %v1122 = vpop.permute.xlu0 %1121
    %1123 = vset.pattern.permute.xlu0 0
    %1124 = vperm.xlu0 %1123, %v1002
    %v1125 = vpop.permute.xlu0 %1124
    %1126 = vset.pattern.permute.xlu0 0
    %1127 = vperm.xlu0 %1126, %v1004
    %v1128 = vpop.permute.xlu0 %1127
    %1129 = vset.pattern.permute.xlu0 0
    %1130 = vperm.xlu0 %1129, %v1006
    %v1131 = vpop.permute.xlu0 %1130
    %1132 = vset.pattern.permute.xlu0 0
    %1133 = vperm.xlu0 %1132, %v1008
    %v1134 = vpop.permute.xlu0 %1133
    %1135 = vset.pattern.permute.xlu0 0
    %1136 = vperm.xlu0 %1135, %v1010
    %v1137 = vpop.permute.xlu0 %1136
    %1138 = vset.pattern.permute.xlu0 0
    %1139 = vperm.xlu0 %1138, %v1012
    %v1140 = vpop.permute.xlu0 %1139
    %v1141 = vlaneseq
    %v1142 = vshrl.u32 %v1141, 7
    %v1143 = vsub.s32 %v530, %v1142
    %v1144 = vrot.slane %v1047, %v1143
    %v1145 = vlaneseq
    %v1146 = vshrl.u32 %v1145, 7
    %v1147 = vsub.s32 %v530, %v1146
    %v1148 = vrot.slane %v1050, %v1147
    %v1149 = vlaneseq
    %v1150 = vshrl.u32 %v1149, 7
    %v1151 = vsub.s32 %v530, %v1150
    %v1152 = vrot.slane %v1053, %v1151
    %v1153 = vlaneseq
    %v1154 = vshrl.u32 %v1153, 7
    %v1155 = vsub.s32 %v530, %v1154
    %v1156 = vrot.slane %v1056, %v1155
    %v1157 = vlaneseq
    %v1158 = vshrl.u32 %v1157, 7
    %v1159 = vsub.s32 %v530, %v1158
    %v1160 = vrot.slane %v1059, %v1159
    %v1161 = vlaneseq
    %v1162 = vshrl.u32 %v1161, 7
    %v1163 = vsub.s32 %v530, %v1162
    %v1164 = vrot.slane %v1062, %v1163
    %v1165 = vlaneseq
    %v1166 = vshrl.u32 %v1165, 7
    %v1167 = vsub.s32 %v530, %v1166
    %v1168 = vrot.slane %v1065, %v1167
    %v1169 = vlaneseq
    %v1170 = vshrl.u32 %v1169, 7
    %v1171 = vsub.s32 %v530, %v1170
    %v1172 = vrot.slane %v1068, %v1171
    %v1173 = vlaneseq
    %v1174 = vshrl.u32 %v1173, 7
    %v1175 = vsub.s32 %v530, %v1174
    %v1176 = vrot.slane %v1071, %v1175
    %v1177 = vlaneseq
    %v1178 = vshrl.u32 %v1177, 7
    %v1179 = vsub.s32 %v530, %v1178
    %v1180 = vrot.slane %v1074, %v1179
    %v1181 = vlaneseq
    %v1182 = vshrl.u32 %v1181, 7
    %v1183 = vsub.s32 %v530, %v1182
    %v1184 = vrot.slane %v1077, %v1183
    %v1185 = vlaneseq
    %v1186 = vshrl.u32 %v1185, 7
    %v1187 = vsub.s32 %v530, %v1186
    %v1188 = vrot.slane %v1080, %v1187
    %v1189 = vlaneseq
    %v1190 = vshrl.u32 %v1189, 7
    %v1191 = vsub.s32 %v530, %v1190
    %v1192 = vrot.slane %v1083, %v1191
    %v1193 = vlaneseq
    %v1194 = vshrl.u32 %v1193, 7
    %v1195 = vsub.s32 %v530, %v1194
    %v1196 = vrot.slane %v1086, %v1195
    %v1197 = vlaneseq
    %v1198 = vshrl.u32 %v1197, 7
    %v1199 = vsub.s32 %v530, %v1198
    %v1200 = vrot.slane %v1089, %v1199
    %v1201 = vlaneseq
    %v1202 = vshrl.u32 %v1201, 7
    %v1203 = vsub.s32 %v530, %v1202
    %v1204 = vrot.slane %v1092, %v1203
    %v1205 = vlaneseq
    %v1206 = vshrl.u32 %v1205, 7
    %v1207 = vsub.s32 %v530, %v1206
    %v1208 = vrot.slane %v1095, %v1207
    %v1209 = vlaneseq
    %v1210 = vshrl.u32 %v1209, 7
    %v1211 = vsub.s32 %v530, %v1210
    %v1212 = vrot.slane %v1098, %v1211
    %v1213 = vlaneseq
    %v1214 = vshrl.u32 %v1213, 7
    %v1215 = vsub.s32 %v530, %v1214
    %v1216 = vrot.slane %v1101, %v1215
    %v1217 = vlaneseq
    %v1218 = vshrl.u32 %v1217, 7
    %v1219 = vsub.s32 %v530, %v1218
    %v1220 = vrot.slane %v1104, %v1219
    %v1221 = vlaneseq
    %v1222 = vshrl.u32 %v1221, 7
    %v1223 = vsub.s32 %v530, %v1222
    %v1224 = vrot.slane %v1107, %v1223
    %v1225 = vlaneseq
    %v1226 = vshrl.u32 %v1225, 7
    %v1227 = vsub.s32 %v530, %v1226
    %v1228 = vrot.slane %v1110, %v1227
    %v1229 = vlaneseq
    %v1230 = vshrl.u32 %v1229, 7
    %v1231 = vsub.s32 %v530, %v1230
    %v1232 = vrot.slane %v1113, %v1231
    %v1233 = vlaneseq
    %v1234 = vshrl.u32 %v1233, 7
    %v1235 = vsub.s32 %v530, %v1234
    %v1236 = vrot.slane %v1116, %v1235
    %v1237 = vlaneseq
    %v1238 = vshrl.u32 %v1237, 7
    %v1239 = vsub.s32 %v530, %v1238
    %v1240 = vrot.slane %v1119, %v1239
    %v1241 = vlaneseq
    %v1242 = vshrl.u32 %v1241, 7
    %v1243 = vsub.s32 %v530, %v1242
    %v1244 = vrot.slane %v1122, %v1243
    %v1245 = vlaneseq
    %v1246 = vshrl.u32 %v1245, 7
    %v1247 = vsub.s32 %v530, %v1246
    %v1248 = vrot.slane %v1125, %v1247
    %v1249 = vlaneseq
    %v1250 = vshrl.u32 %v1249, 7
    %v1251 = vsub.s32 %v530, %v1250
    %v1252 = vrot.slane %v1128, %v1251
    %v1253 = vlaneseq
    %v1254 = vshrl.u32 %v1253, 7
    %v1255 = vsub.s32 %v530, %v1254
    %v1256 = vrot.slane %v1131, %v1255
    %v1257 = vlaneseq
    %v1258 = vshrl.u32 %v1257, 7
    %v1259 = vsub.s32 %v530, %v1258
    %v1260 = vrot.slane %v1134, %v1259
    %v1261 = vlaneseq
    %v1262 = vshrl.u32 %v1261, 7
    %v1263 = vsub.s32 %v530, %v1262
    %v1264 = vrot.slane %v1137, %v1263
    %v1265 = vlaneseq
    %v1266 = vshrl.u32 %v1265, 7
    %v1267 = vsub.s32 %v530, %v1266
    %v1268 = vrot.slane %v1140, %v1267
    %v1269 = vsel %vm659, %v1148, %v1144
    %v1270 = vsel %vm659, %v1156, %v1152
    %v1271 = vsel %vm659, %v1164, %v1160
    %v1272 = vsel %vm659, %v1172, %v1168
    %v1273 = vsel %vm659, %v1180, %v1176
    %v1274 = vsel %vm659, %v1188, %v1184
    %v1275 = vsel %vm659, %v1196, %v1192
    %v1276 = vsel %vm659, %v1204, %v1200
    %v1277 = vsel %vm659, %v1212, %v1208
    %v1278 = vsel %vm659, %v1220, %v1216
    %v1279 = vsel %vm659, %v1228, %v1224
    %v1280 = vsel %vm659, %v1236, %v1232
    %v1281 = vsel %vm659, %v1244, %v1240
    %v1282 = vsel %vm659, %v1252, %v1248
    %v1283 = vsel %vm659, %v1260, %v1256
    %v1284 = vsel %vm659, %v1268, %v1264
    %v1301 = vsel %vm692, %v1269, 0.0
    %1302 = vadd.xlane.f32.xlu0 %v1301
    %v1303 = vpop.xlane.xlu0 %1302
    %v1304 = vsel %vm692, %v1270, 0.0
    %1305 = vadd.xlane.f32.xlu0 %v1304
    %v1306 = vpop.xlane.xlu0 %1305
    %v1307 = vsel %vm692, %v1271, 0.0
    %1308 = vadd.xlane.f32.xlu0 %v1307
    %v1309 = vpop.xlane.xlu0 %1308
    %v1310 = vsel %vm692, %v1272, 0.0
    %1311 = vadd.xlane.f32.xlu0 %v1310
    %v1312 = vpop.xlane.xlu0 %1311
    %v1313 = vsel %vm692, %v1273, 0.0
    %1314 = vadd.xlane.f32.xlu0 %v1313
    %v1315 = vpop.xlane.xlu0 %1314
    %v1316 = vsel %vm692, %v1274, 0.0
    %1317 = vadd.xlane.f32.xlu0 %v1316
    %v1318 = vpop.xlane.xlu0 %1317
    %v1319 = vsel %vm692, %v1275, 0.0
    %1320 = vadd.xlane.f32.xlu0 %v1319
    %v1321 = vpop.xlane.xlu0 %1320
    %v1322 = vsel %vm692, %v1276, 0.0
    %1323 = vadd.xlane.f32.xlu0 %v1322
    %v1324 = vpop.xlane.xlu0 %1323
    %v1325 = vsel %vm692, %v1277, 0.0
    %1326 = vadd.xlane.f32.xlu0 %v1325
    %v1327 = vpop.xlane.xlu0 %1326
    %v1328 = vsel %vm692, %v1278, 0.0
    %1329 = vadd.xlane.f32.xlu0 %v1328
    %v1330 = vpop.xlane.xlu0 %1329
    %v1331 = vsel %vm692, %v1279, 0.0
    %1332 = vadd.xlane.f32.xlu0 %v1331
    %v1333 = vpop.xlane.xlu0 %1332
    %v1334 = vsel %vm692, %v1280, 0.0
    %1335 = vadd.xlane.f32.xlu0 %v1334
    %v1336 = vpop.xlane.xlu0 %1335
    %v1337 = vsel %vm692, %v1281, 0.0
    %1338 = vadd.xlane.f32.xlu0 %v1337
    %v1339 = vpop.xlane.xlu0 %1338
    %v1340 = vsel %vm692, %v1282, 0.0
    %1341 = vadd.xlane.f32.xlu0 %v1340
    %v1342 = vpop.xlane.xlu0 %1341
    %v1343 = vsel %vm692, %v1283, 0.0
    %1344 = vadd.xlane.f32.xlu0 %v1343
    %v1345 = vpop.xlane.xlu0 %1344
    %v1346 = vsel %vm692, %v1284, 0.0
    %1347 = vadd.xlane.f32.xlu0 %v1346
    %v1348 = vpop.xlane.xlu0 %1347
    %v1349 = vrcp.pop %v1303
    %v1350 = vmul.f32 1.0, %v1349
    %v1351 = vrcp.pop %v1306
    %v1352 = vmul.f32 1.0, %v1351
    %v1353 = vrcp.pop %v1309
    %v1354 = vmul.f32 1.0, %v1353
    %v1355 = vrcp.pop %v1312
    %v1356 = vmul.f32 1.0, %v1355
    %v1357 = vrcp.pop %v1315
    %v1358 = vmul.f32 1.0, %v1357
    %v1359 = vrcp.pop %v1318
    %v1360 = vmul.f32 1.0, %v1359
    %v1361 = vrcp.pop %v1321
    %v1362 = vmul.f32 1.0, %v1361
    %v1363 = vrcp.pop %v1324
    %v1364 = vmul.f32 1.0, %v1363
    %v1365 = vrcp.pop %v1327
    %v1366 = vmul.f32 1.0, %v1365
    %v1367 = vrcp.pop %v1330
    %v1368 = vmul.f32 1.0, %v1367
    %v1369 = vrcp.pop %v1333
    %v1370 = vmul.f32 1.0, %v1369
    %v1371 = vrcp.pop %v1336
    %v1372 = vmul.f32 1.0, %v1371
    %v1373 = vrcp.pop %v1339
    %v1374 = vmul.f32 1.0, %v1373
    %v1375 = vrcp.pop %v1342
    %v1376 = vmul.f32 1.0, %v1375
    %v1377 = vrcp.pop %v1345
    %v1378 = vmul.f32 1.0, %v1377
    %v1379 = vrcp.pop %v1348
    %v1380 = vmul.f32 1.0, %v1379
    %v1397 = vlaneseq
    %v1398 = vshrl.u32 %v1397, 7
    %v1399 = vsub.s32 0, %v1398
    %v1400 = vrot.slane %v1350, %v1399
    %v1401 = vlaneseq
    %v1402 = vshrl.u32 %v1401, 7
    %v1403 = vsub.s32 1, %v1402
    %v1404 = vrot.slane %v1350, %v1403
    %v1405 = vlaneseq
    %v1406 = vshrl.u32 %v1405, 7
    %v1407 = vsub.s32 0, %v1406
    %v1408 = vrot.slane %v1352, %v1407
    %v1409 = vlaneseq
    %v1410 = vshrl.u32 %v1409, 7
    %v1411 = vsub.s32 1, %v1410
    %v1412 = vrot.slane %v1352, %v1411
    %v1413 = vlaneseq
    %v1414 = vshrl.u32 %v1413, 7
    %v1415 = vsub.s32 0, %v1414
    %v1416 = vrot.slane %v1354, %v1415
    %v1417 = vlaneseq
    %v1418 = vshrl.u32 %v1417, 7
    %v1419 = vsub.s32 1, %v1418
    %v1420 = vrot.slane %v1354, %v1419
    %v1421 = vlaneseq
    %v1422 = vshrl.u32 %v1421, 7
    %v1423 = vsub.s32 0, %v1422
    %v1424 = vrot.slane %v1356, %v1423
    %v1425 = vlaneseq
    %v1426 = vshrl.u32 %v1425, 7
    %v1427 = vsub.s32 1, %v1426
    %v1428 = vrot.slane %v1356, %v1427
    %v1429 = vlaneseq
    %v1430 = vshrl.u32 %v1429, 7
    %v1431 = vsub.s32 0, %v1430
    %v1432 = vrot.slane %v1358, %v1431
    %v1433 = vlaneseq
    %v1434 = vshrl.u32 %v1433, 7
    %v1435 = vsub.s32 1, %v1434
    %v1436 = vrot.slane %v1358, %v1435
    %v1437 = vlaneseq
    %v1438 = vshrl.u32 %v1437, 7
    %v1439 = vsub.s32 0, %v1438
    %v1440 = vrot.slane %v1360, %v1439
    %v1441 = vlaneseq
    %v1442 = vshrl.u32 %v1441, 7
    %v1443 = vsub.s32 1, %v1442
    %v1444 = vrot.slane %v1360, %v1443
    %v1445 = vlaneseq
    %v1446 = vshrl.u32 %v1445, 7
    %v1447 = vsub.s32 0, %v1446
    %v1448 = vrot.slane %v1362, %v1447
    %v1449 = vlaneseq
    %v1450 = vshrl.u32 %v1449, 7
    %v1451 = vsub.s32 1, %v1450
    %v1452 = vrot.slane %v1362, %v1451
    %v1453 = vlaneseq
    %v1454 = vshrl.u32 %v1453, 7
    %v1455 = vsub.s32 0, %v1454
    %v1456 = vrot.slane %v1364, %v1455
    %v1457 = vlaneseq
    %v1458 = vshrl.u32 %v1457, 7
    %v1459 = vsub.s32 1, %v1458
    %v1460 = vrot.slane %v1364, %v1459
    %v1461 = vlaneseq
    %v1462 = vshrl.u32 %v1461, 7
    %v1463 = vsub.s32 0, %v1462
    %v1464 = vrot.slane %v1366, %v1463
    %v1465 = vlaneseq
    %v1466 = vshrl.u32 %v1465, 7
    %v1467 = vsub.s32 1, %v1466
    %v1468 = vrot.slane %v1366, %v1467
    %v1469 = vlaneseq
    %v1470 = vshrl.u32 %v1469, 7
    %v1471 = vsub.s32 0, %v1470
    %v1472 = vrot.slane %v1368, %v1471
    %v1473 = vlaneseq
    %v1474 = vshrl.u32 %v1473, 7
    %v1475 = vsub.s32 1, %v1474
    %v1476 = vrot.slane %v1368, %v1475
    %v1477 = vlaneseq
    %v1478 = vshrl.u32 %v1477, 7
    %v1479 = vsub.s32 0, %v1478
    %v1480 = vrot.slane %v1370, %v1479
    %v1481 = vlaneseq
    %v1482 = vshrl.u32 %v1481, 7
    %v1483 = vsub.s32 1, %v1482
    %v1484 = vrot.slane %v1370, %v1483
    %v1485 = vlaneseq
    %v1486 = vshrl.u32 %v1485, 7
    %v1487 = vsub.s32 0, %v1486
    %v1488 = vrot.slane %v1372, %v1487
    %v1489 = vlaneseq
    %v1490 = vshrl.u32 %v1489, 7
    %v1491 = vsub.s32 1, %v1490
    %v1492 = vrot.slane %v1372, %v1491
    %v1493 = vlaneseq
    %v1494 = vshrl.u32 %v1493, 7
    %v1495 = vsub.s32 0, %v1494
    %v1496 = vrot.slane %v1374, %v1495
    %v1497 = vlaneseq
    %v1498 = vshrl.u32 %v1497, 7
    %v1499 = vsub.s32 1, %v1498
    %v1500 = vrot.slane %v1374, %v1499
    %v1501 = vlaneseq
    %v1502 = vshrl.u32 %v1501, 7
    %v1503 = vsub.s32 0, %v1502
    %v1504 = vrot.slane %v1376, %v1503
    %v1505 = vlaneseq
    %v1506 = vshrl.u32 %v1505, 7
    %v1507 = vsub.s32 1, %v1506
    %v1508 = vrot.slane %v1376, %v1507
    %v1509 = vlaneseq
    %v1510 = vshrl.u32 %v1509, 7
    %v1511 = vsub.s32 0, %v1510
    %v1512 = vrot.slane %v1378, %v1511
    %v1513 = vlaneseq
    %v1514 = vshrl.u32 %v1513, 7
    %v1515 = vsub.s32 1, %v1514
    %v1516 = vrot.slane %v1378, %v1515
    %v1517 = vlaneseq
    %v1518 = vshrl.u32 %v1517, 7
    %v1519 = vsub.s32 0, %v1518
    %v1520 = vrot.slane %v1380, %v1519
    %v1521 = vlaneseq
    %v1522 = vshrl.u32 %v1521, 7
    %v1523 = vsub.s32 1, %v1522
    %v1524 = vrot.slane %v1380, %v1523
    %v1557 = vmul.f32 %v950, %v1400
    %v1558 = vmul.f32 %v952, %v1404
    %v1559 = vmul.f32 %v954, %v1408
    %v1560 = vmul.f32 %v956, %v1412
    %v1561 = vmul.f32 %v958, %v1416
    %v1562 = vmul.f32 %v960, %v1420
    %v1563 = vmul.f32 %v962, %v1424
    %v1564 = vmul.f32 %v964, %v1428
    %v1565 = vmul.f32 %v966, %v1432
    %v1566 = vmul.f32 %v968, %v1436
    %v1567 = vmul.f32 %v970, %v1440
    %v1568 = vmul.f32 %v972, %v1444
    %v1569 = vmul.f32 %v974, %v1448
    %v1570 = vmul.f32 %v976, %v1452
    %v1571 = vmul.f32 %v978, %v1456
    %v1572 = vmul.f32 %v980, %v1460
    %v1573 = vmul.f32 %v982, %v1464
    %v1574 = vmul.f32 %v984, %v1468
    %v1575 = vmul.f32 %v986, %v1472
    %v1576 = vmul.f32 %v988, %v1476
    %v1577 = vmul.f32 %v990, %v1480
    %v1578 = vmul.f32 %v992, %v1484
    %v1579 = vmul.f32 %v994, %v1488
    %v1580 = vmul.f32 %v996, %v1492
    %v1581 = vmul.f32 %v998, %v1496
    %v1582 = vmul.f32 %v1000, %v1500
    %v1583 = vmul.f32 %v1002, %v1504
    %v1584 = vmul.f32 %v1004, %v1508
    %v1585 = vmul.f32 %v1006, %v1512
    %v1586 = vmul.f32 %v1008, %v1516
    %v1587 = vmul.f32 %v1010, %v1520
    %v1588 = vmul.f32 %v1012, %v1524
    %v1589 = vld [vmem:[#allocation5] sm:$0xff]
    %v1590 = vld [vmem:[#allocation5 + $0x8] sm:$0xff]
    %v1591 = vld [vmem:[#allocation5 + $0x10] sm:$0xff]
    %v1592 = vld [vmem:[#allocation5 + $0x18] sm:$0xff]
    %v1593 = vld [vmem:[#allocation5 + $0x20] sm:$0xff]
    %v1594 = vld [vmem:[#allocation5 + $0x28] sm:$0xff]
    %v1595 = vld [vmem:[#allocation5 + $0x30] sm:$0xff]
    %v1596 = vld [vmem:[#allocation5 + $0x38] sm:$0xff]
    %v1597 = vld [vmem:[#allocation5 + $0x40] sm:$0xff]
    %v1598 = vld [vmem:[#allocation5 + $0x48] sm:$0xff]
    %v1599 = vld [vmem:[#allocation5 + $0x50] sm:$0xff]
    %v1600 = vld [vmem:[#allocation5 + $0x58] sm:$0xff]
    %v1601 = vld [vmem:[#allocation5 + $0x60] sm:$0xff]
    %v1602 = vld [vmem:[#allocation5 + $0x68] sm:$0xff]
    %v1603 = vld [vmem:[#allocation5 + $0x70] sm:$0xff]
    %v1604 = vld [vmem:[#allocation5 + $0x78] sm:$0xff]
    %1606 = vset.pattern.permute.xlu0 0
    %1607 = vperm.xlu0 %1606, %v1557
    %v1608 = vpop.permute.xlu0 %1607
    %1611 = vset.pattern.permute.xlu0 0
    %1612 = vperm.xlu0 %1611, %v1558
    %v1613 = vpop.permute.xlu0 %1612
    %1616 = vset.pattern.permute.xlu0 0
    %1617 = vperm.xlu0 %1616, %v1559
    %v1618 = vpop.permute.xlu0 %1617
    %1621 = vset.pattern.permute.xlu0 0
    %1622 = vperm.xlu0 %1621, %v1560
    %v1623 = vpop.permute.xlu0 %1622
    %1626 = vset.pattern.permute.xlu0 0
    %1627 = vperm.xlu0 %1626, %v1561
    %v1628 = vpop.permute.xlu0 %1627
    %1631 = vset.pattern.permute.xlu0 0
    %1632 = vperm.xlu0 %1631, %v1562
    %v1633 = vpop.permute.xlu0 %1632
    %1636 = vset.pattern.permute.xlu0 0
    %1637 = vperm.xlu0 %1636, %v1563
    %v1638 = vpop.permute.xlu0 %1637
    %1641 = vset.pattern.permute.xlu0 0
    %1642 = vperm.xlu0 %1641, %v1564
    %v1643 = vpop.permute.xlu0 %1642
    %1646 = vset.pattern.permute.xlu0 0
    %1647 = vperm.xlu0 %1646, %v1565
    %v1648 = vpop.permute.xlu0 %1647
    %1651 = vset.pattern.permute.xlu0 0
    %1652 = vperm.xlu0 %1651, %v1566
    %v1653 = vpop.permute.xlu0 %1652
    %1656 = vset.pattern.permute.xlu0 0
    %1657 = vperm.xlu0 %1656, %v1567
    %v1658 = vpop.permute.xlu0 %1657
    %1661 = vset.pattern.permute.xlu0 0
    %1662 = vperm.xlu0 %1661, %v1568
    %v1663 = vpop.permute.xlu0 %1662
    %1666 = vset.pattern.permute.xlu0 0
    %1667 = vperm.xlu0 %1666, %v1569
    %v1668 = vpop.permute.xlu0 %1667
    %1671 = vset.pattern.permute.xlu0 0
    %1672 = vperm.xlu0 %1671, %v1570
    %v1673 = vpop.permute.xlu0 %1672
    %1676 = vset.pattern.permute.xlu0 0
    %1677 = vperm.xlu0 %1676, %v1571
    %v1678 = vpop.permute.xlu0 %1677
    %1681 = vset.pattern.permute.xlu0 0
    %1682 = vperm.xlu0 %1681, %v1572
    %v1683 = vpop.permute.xlu0 %1682
    %1686 = vset.pattern.permute.xlu0 0
    %1687 = vperm.xlu0 %1686, %v1573
    %v1688 = vpop.permute.xlu0 %1687
    %1691 = vset.pattern.permute.xlu0 0
    %1692 = vperm.xlu0 %1691, %v1574
    %v1693 = vpop.permute.xlu0 %1692
    %1696 = vset.pattern.permute.xlu0 0
    %1697 = vperm.xlu0 %1696, %v1575
    %v1698 = vpop.permute.xlu0 %1697
    %1701 = vset.pattern.permute.xlu0 0
    %1702 = vperm.xlu0 %1701, %v1576
    %v1703 = vpop.permute.xlu0 %1702
    %1706 = vset.pattern.permute.xlu0 0
    %1707 = vperm.xlu0 %1706, %v1577
    %v1708 = vpop.permute.xlu0 %1707
    %1711 = vset.pattern.permute.xlu0 0
    %1712 = vperm.xlu0 %1711, %v1578
    %v1713 = vpop.permute.xlu0 %1712
    %1716 = vset.pattern.permute.xlu0 0
    %1717 = vperm.xlu0 %1716, %v1579
    %v1718 = vpop.permute.xlu0 %1717
    %1721 = vset.pattern.permute.xlu0 0
    %1722 = vperm.xlu0 %1721, %v1580
    %v1723 = vpop.permute.xlu0 %1722
    %1726 = vset.pattern.permute.xlu0 0
    %1727 = vperm.xlu0 %1726, %v1581
    %v1728 = vpop.permute.xlu0 %1727
    %1731 = vset.pattern.permute.xlu0 0
    %1732 = vperm.xlu0 %1731, %v1582
    %v1733 = vpop.permute.xlu0 %1732
    %1736 = vset.pattern.permute.xlu0 0
    %1737 = vperm.xlu0 %1736, %v1583
    %v1738 = vpop.permute.xlu0 %1737
    %1741 = vset.pattern.permute.xlu0 0
    %1742 = vperm.xlu0 %1741, %v1584
    %v1743 = vpop.permute.xlu0 %1742
    %1746 = vset.pattern.permute.xlu0 0
    %1747 = vperm.xlu0 %1746, %v1585
    %v1748 = vpop.permute.xlu0 %1747
    %1751 = vset.pattern.permute.xlu0 0
    %1752 = vperm.xlu0 %1751, %v1586
    %v1753 = vpop.permute.xlu0 %1752
    %1756 = vset.pattern.permute.xlu0 0
    %1757 = vperm.xlu0 %1756, %v1587
    %v1758 = vpop.permute.xlu0 %1757
    %1761 = vset.pattern.permute.xlu0 0
    %1762 = vperm.xlu0 %1761, %v1588
    %v1763 = vpop.permute.xlu0 %1762
    %v1765 = vmul.f32 %v177, %v1608
    %v1766 = vmul.f32 %v182, %v1613
    %v1767 = vmul.f32 %v187, %v1618
    %v1768 = vmul.f32 %v192, %v1623
    %v1769 = vmul.f32 %v197, %v1628
    %v1770 = vmul.f32 %v202, %v1633
    %v1771 = vmul.f32 %v207, %v1638
    %v1772 = vmul.f32 %v212, %v1643
    %v1773 = vmul.f32 %v217, %v1648
    %v1774 = vmul.f32 %v222, %v1653
    %v1775 = vmul.f32 %v227, %v1658
    %v1776 = vmul.f32 %v232, %v1663
    %v1777 = vmul.f32 %v237, %v1668
    %v1778 = vmul.f32 %v242, %v1673
    %v1779 = vmul.f32 %v247, %v1678
    %v1780 = vmul.f32 %v252, %v1683
    %v1781 = vmul.f32 %v257, %v1688
    %v1782 = vmul.f32 %v262, %v1693
    %v1783 = vmul.f32 %v267, %v1698
    %v1784 = vmul.f32 %v272, %v1703
    %v1785 = vmul.f32 %v277, %v1708
    %v1786 = vmul.f32 %v282, %v1713
    %v1787 = vmul.f32 %v287, %v1718
    %v1788 = vmul.f32 %v292, %v1723
    %v1789 = vmul.f32 %v297, %v1728
    %v1790 = vmul.f32 %v302, %v1733
    %v1791 = vmul.f32 %v307, %v1738
    %v1792 = vmul.f32 %v312, %v1743
    %v1793 = vmul.f32 %v317, %v1748
    %v1794 = vmul.f32 %v322, %v1753
    %v1795 = vmul.f32 %v327, %v1758
    %v1796 = vmul.f32 %v332, %v1763
    %v1797 = vadd.f32 %v1765, %v1766
    %v1798 = vadd.f32 %v1767, %v1768
    %v1799 = vadd.f32 %v1769, %v1770
    %v1800 = vadd.f32 %v1771, %v1772
    %v1801 = vadd.f32 %v1773, %v1774
    %v1802 = vadd.f32 %v1775, %v1776
    %v1803 = vadd.f32 %v1777, %v1778
    %v1804 = vadd.f32 %v1779, %v1780
    %v1805 = vadd.f32 %v1781, %v1782
    %v1806 = vadd.f32 %v1783, %v1784
    %v1807 = vadd.f32 %v1785, %v1786
    %v1808 = vadd.f32 %v1787, %v1788
    %v1809 = vadd.f32 %v1789, %v1790
    %v1810 = vadd.f32 %v1791, %v1792
    %v1811 = vadd.f32 %v1793, %v1794
    %v1812 = vadd.f32 %v1795, %v1796
    %v1813 = vadd.f32 %v1797, %v1589
    %v1814 = vadd.f32 %v1798, %v1590
    %v1815 = vadd.f32 %v1799, %v1591
    %v1816 = vadd.f32 %v1800, %v1592
    %v1817 = vadd.f32 %v1801, %v1593
    %v1818 = vadd.f32 %v1802, %v1594
    %v1819 = vadd.f32 %v1803, %v1595
    %v1820 = vadd.f32 %v1804, %v1596
    %v1821 = vadd.f32 %v1805, %v1597
    %v1822 = vadd.f32 %v1806, %v1598
    %v1823 = vadd.f32 %v1807, %v1599
    %v1824 = vadd.f32 %v1808, %v1600
    %v1825 = vadd.f32 %v1809, %v1601
    %v1826 = vadd.f32 %v1810, %v1602
    %v1827 = vadd.f32 %v1811, %v1603
    %v1828 = vadd.f32 %v1812, %v1604
    %v1829 = vmul.f32 %v1813, %v1813
    %v1830 = vmul.f32 %v1814, %v1814
    %v1831 = vmul.f32 %v1815, %v1815
    %v1832 = vmul.f32 %v1816, %v1816
    %v1833 = vmul.f32 %v1817, %v1817
    %v1834 = vmul.f32 %v1818, %v1818
    %v1835 = vmul.f32 %v1819, %v1819
    %v1836 = vmul.f32 %v1820, %v1820
    %v1837 = vmul.f32 %v1821, %v1821
    %v1838 = vmul.f32 %v1822, %v1822
    %v1839 = vmul.f32 %v1823, %v1823
    %v1840 = vmul.f32 %v1824, %v1824
    %v1841 = vmul.f32 %v1825, %v1825
    %v1842 = vmul.f32 %v1826, %v1826
    %v1843 = vmul.f32 %v1827, %v1827
    %v1844 = vmul.f32 %v1828, %v1828
    %1845 = vadd.xlane.f32.xlu0 %v1829
    %v1846 = vpop.xlane.xlu0 %1845
    %1847 = vadd.xlane.f32.xlu0 %v1830
    %v1848 = vpop.xlane.xlu0 %1847
    %1849 = vadd.xlane.f32.xlu0 %v1831
    %v1850 = vpop.xlane.xlu0 %1849
    %1851 = vadd.xlane.f32.xlu0 %v1832
    %v1852 = vpop.xlane.xlu0 %1851
    %1853 = vadd.xlane.f32.xlu0 %v1833
    %v1854 = vpop.xlane.xlu0 %1853
    %1855 = vadd.xlane.f32.xlu0 %v1834
    %v1856 = vpop.xlane.xlu0 %1855
    %1857 = vadd.xlane.f32.xlu0 %v1835
    %v1858 = vpop.xlane.xlu0 %1857
    %1859 = vadd.xlane.f32.xlu0 %v1836
    %v1860 = vpop.xlane.xlu0 %1859
    %1861 = vadd.xlane.f32.xlu0 %v1837
    %v1862 = vpop.xlane.xlu0 %1861
    %1863 = vadd.xlane.f32.xlu0 %v1838
    %v1864 = vpop.xlane.xlu0 %1863
    %1865 = vadd.xlane.f32.xlu0 %v1839
    %v1866 = vpop.xlane.xlu0 %1865
    %1867 = vadd.xlane.f32.xlu0 %v1840
    %v1868 = vpop.xlane.xlu0 %1867
    %1869 = vadd.xlane.f32.xlu0 %v1841
    %v1870 = vpop.xlane.xlu0 %1869
    %1871 = vadd.xlane.f32.xlu0 %v1842
    %v1872 = vpop.xlane.xlu0 %1871
    %1873 = vadd.xlane.f32.xlu0 %v1843
    %v1874 = vpop.xlane.xlu0 %1873
    %1875 = vadd.xlane.f32.xlu0 %v1844
    %v1876 = vpop.xlane.xlu0 %1875
    %v1877 = vrsqrt.pop %v1846
    %v1878 = vmul.f32 %v1846, %v1877
    %vm1879 = vcmp.eq.f32.partialorder %v1846, inf
    %v1880 = vsel %vm1879, %v1846, %v1878
    %vm1881 = vcmp.eq.f32.partialorder %v1846, 0.0
    %v1882 = vand.u32 %v1846, 2147483648
    %v1883 = vsel %vm1881, %v1882, %v1880
    %v1884 = vrsqrt.pop %v1848
    %v1885 = vmul.f32 %v1848, %v1884
    %vm1886 = vcmp.eq.f32.partialorder %v1848, inf
    %v1887 = vsel %vm1886, %v1848, %v1885
    %vm1888 = vcmp.eq.f32.partialorder %v1848, 0.0
    %v1889 = vand.u32 %v1848, 2147483648
    %v1890 = vsel %vm1888, %v1889, %v1887
    %v1891 = vrsqrt.pop %v1850
    %v1892 = vmul.f32 %v1850, %v1891
    %vm1893 = vcmp.eq.f32.partialorder %v1850, inf
    %v1894 = vsel %vm1893, %v1850, %v1892
    %vm1895 = vcmp.eq.f32.partialorder %v1850, 0.0
    %v1896 = vand.u32 %v1850, 2147483648
    %v1897 = vsel %vm1895, %v1896, %v1894
    %v1898 = vrsqrt.pop %v1852
    %v1899 = vmul.f32 %v1852, %v1898
    %vm1900 = vcmp.eq.f32.partialorder %v1852, inf
    %v1901 = vsel %vm1900, %v1852, %v1899
    %vm1902 = vcmp.eq.f32.partialorder %v1852, 0.0
    %v1903 = vand.u32 %v1852, 2147483648
    %v1904 = vsel %vm1902, %v1903, %v1901
    %v1905 = vrsqrt.pop %v1854
    %v1906 = vmul.f32 %v1854, %v1905
    %vm1907 = vcmp.eq.f32.partialorder %v1854, inf
    %v1908 = vsel %vm1907, %v1854, %v1906
    %vm1909 = vcmp.eq.f32.partialorder %v1854, 0.0
    %v1910 = vand.u32 %v1854, 2147483648
    %v1911 = vsel %vm1909, %v1910, %v1908
    %v1912 = vrsqrt.pop %v1856
    %v1913 = vmul.f32 %v1856, %v1912
    %vm1914 = vcmp.eq.f32.partialorder %v1856, inf
    %v1915 = vsel %vm1914, %v1856, %v1913
    %vm1916 = vcmp.eq.f32.partialorder %v1856, 0.0
    %v1917 = vand.u32 %v1856, 2147483648
    %v1918 = vsel %vm1916, %v1917, %v1915
    %v1919 = vrsqrt.pop %v1858
    %v1920 = vmul.f32 %v1858, %v1919
    %vm1921 = vcmp.eq.f32.partialorder %v1858, inf
    %v1922 = vsel %vm1921, %v1858, %v1920
    %vm1923 = vcmp.eq.f32.partialorder %v1858, 0.0
    %v1924 = vand.u32 %v1858, 2147483648
    %v1925 = vsel %vm1923, %v1924, %v1922
    %v1926 = vrsqrt.pop %v1860
    %v1927 = vmul.f32 %v1860, %v1926
    %vm1928 = vcmp.eq.f32.partialorder %v1860, inf
    %v1929 = vsel %vm1928, %v1860, %v1927
    %vm1930 = vcmp.eq.f32.partialorder %v1860, 0.0
    %v1931 = vand.u32 %v1860, 2147483648
    %v1932 = vsel %vm1930, %v1931, %v1929
    %v1933 = vrsqrt.pop %v1862
    %v1934 = vmul.f32 %v1862, %v1933
    %vm1935 = vcmp.eq.f32.partialorder %v1862, inf
    %v1936 = vsel %vm1935, %v1862, %v1934
    %vm1937 = vcmp.eq.f32.partialorder %v1862, 0.0
    %v1938 = vand.u32 %v1862, 2147483648
    %v1939 = vsel %vm1937, %v1938, %v1936
    %v1940 = vrsqrt.pop %v1864
    %v1941 = vmul.f32 %v1864, %v1940
    %vm1942 = vcmp.eq.f32.partialorder %v1864, inf
    %v1943 = vsel %vm1942, %v1864, %v1941
    %vm1944 = vcmp.eq.f32.partialorder %v1864, 0.0
    %v1945 = vand.u32 %v1864, 2147483648
    %v1946 = vsel %vm1944, %v1945, %v1943
    %v1947 = vrsqrt.pop %v1866
    %v1948 = vmul.f32 %v1866, %v1947
    %vm1949 = vcmp.eq.f32.partialorder %v1866, inf
    %v1950 = vsel %vm1949, %v1866, %v1948
    %vm1951 = vcmp.eq.f32.partialorder %v1866, 0.0
    %v1952 = vand.u32 %v1866, 2147483648
    %v1953 = vsel %vm1951, %v1952, %v1950
    %v1954 = vrsqrt.pop %v1868
    %v1955 = vmul.f32 %v1868, %v1954
    %vm1956 = vcmp.eq.f32.partialorder %v1868, inf
    %v1957 = vsel %vm1956, %v1868, %v1955
    %vm1958 = vcmp.eq.f32.partialorder %v1868, 0.0
    %v1959 = vand.u32 %v1868, 2147483648
    %v1960 = vsel %vm1958, %v1959, %v1957
    %v1961 = vrsqrt.pop %v1870
    %v1962 = vmul.f32 %v1870, %v1961
    %vm1963 = vcmp.eq.f32.partialorder %v1870, inf
    %v1964 = vsel %vm1963, %v1870, %v1962
    %vm1965 = vcmp.eq.f32.partialorder %v1870, 0.0
    %v1966 = vand.u32 %v1870, 2147483648
    %v1967 = vsel %vm1965, %v1966, %v1964
    %v1968 = vrsqrt.pop %v1872
    %v1969 = vmul.f32 %v1872, %v1968
    %vm1970 = vcmp.eq.f32.partialorder %v1872, inf
    %v1971 = vsel %vm1970, %v1872, %v1969
    %vm1972 = vcmp.eq.f32.partialorder %v1872, 0.0
    %v1973 = vand.u32 %v1872, 2147483648
    %v1974 = vsel %vm1972, %v1973, %v1971
    %v1975 = vrsqrt.pop %v1874
    %v1976 = vmul.f32 %v1874, %v1975
    %vm1977 = vcmp.eq.f32.partialorder %v1874, inf
    %v1978 = vsel %vm1977, %v1874, %v1976
    %vm1979 = vcmp.eq.f32.partialorder %v1874, 0.0
    %v1980 = vand.u32 %v1874, 2147483648
    %v1981 = vsel %vm1979, %v1980, %v1978
    %v1982 = vrsqrt.pop %v1876
    %v1983 = vmul.f32 %v1876, %v1982
    %vm1984 = vcmp.eq.f32.partialorder %v1876, inf
    %v1985 = vsel %vm1984, %v1876, %v1983
    %vm1986 = vcmp.eq.f32.partialorder %v1876, 0.0
    %v1987 = vand.u32 %v1876, 2147483648
    %v1988 = vsel %vm1986, %v1987, %v1985
    %v1989 = vmax.f32 %v1883, 1e-12
    %v1990 = vmax.f32 %v1890, 1e-12
    %v1991 = vmax.f32 %v1897, 1e-12
    %v1992 = vmax.f32 %v1904, 1e-12
    %v1993 = vmax.f32 %v1911, 1e-12
    %v1994 = vmax.f32 %v1918, 1e-12
    %v1995 = vmax.f32 %v1925, 1e-12
    %v1996 = vmax.f32 %v1932, 1e-12
    %v1997 = vmax.f32 %v1939, 1e-12
    %v1998 = vmax.f32 %v1946, 1e-12
    %v1999 = vmax.f32 %v1953, 1e-12
    %v2000 = vmax.f32 %v1960, 1e-12
    %v2001 = vmax.f32 %v1967, 1e-12
    %v2002 = vmax.f32 %v1974, 1e-12
    %v2003 = vmax.f32 %v1981, 1e-12
    %v2004 = vmax.f32 %v1988, 1e-12
    %v2005 = vrcp.pop %v1989
    %v2006 = vmul.f32 1.0, %v2005
    %v2007 = vrcp.pop %v1990
    %v2008 = vmul.f32 1.0, %v2007
    %v2009 = vrcp.pop %v1991
    %v2010 = vmul.f32 1.0, %v2009
    %v2011 = vrcp.pop %v1992
    %v2012 = vmul.f32 1.0, %v2011
    %v2013 = vrcp.pop %v1993
    %v2014 = vmul.f32 1.0, %v2013
    %v2015 = vrcp.pop %v1994
    %v2016 = vmul.f32 1.0, %v2015
    %v2017 = vrcp.pop %v1995
    %v2018 = vmul.f32 1.0, %v2017
    %v2019 = vrcp.pop %v1996
    %v2020 = vmul.f32 1.0, %v2019
    %v2021 = vrcp.pop %v1997
    %v2022 = vmul.f32 1.0, %v2021
    %v2023 = vrcp.pop %v1998
    %v2024 = vmul.f32 1.0, %v2023
    %v2025 = vrcp.pop %v1999
    %v2026 = vmul.f32 1.0, %v2025
    %v2027 = vrcp.pop %v2000
    %v2028 = vmul.f32 1.0, %v2027
    %v2029 = vrcp.pop %v2001
    %v2030 = vmul.f32 1.0, %v2029
    %v2031 = vrcp.pop %v2002
    %v2032 = vmul.f32 1.0, %v2031
    %v2033 = vrcp.pop %v2003
    %v2034 = vmul.f32 1.0, %v2033
    %v2035 = vrcp.pop %v2004
    %v2036 = vmul.f32 1.0, %v2035
    %v2037 = vmul.f32 %v1813, %v2006
    %v2038 = vmul.f32 %v1814, %v2008
    %v2039 = vmul.f32 %v1815, %v2010
    %v2040 = vmul.f32 %v1816, %v2012
    %v2041 = vmul.f32 %v1817, %v2014
    %v2042 = vmul.f32 %v1818, %v2016
    %v2043 = vmul.f32 %v1819, %v2018
    %v2044 = vmul.f32 %v1820, %v2020
    %v2045 = vmul.f32 %v1821, %v2022
    %v2046 = vmul.f32 %v1822, %v2024
    %v2047 = vmul.f32 %v1823, %v2026
    %v2048 = vmul.f32 %v1824, %v2028
    %v2049 = vmul.f32 %v1825, %v2030
    %v2050 = vmul.f32 %v1826, %v2032
    %v2051 = vmul.f32 %v1827, %v2034
    %v2052 = vmul.f32 %v1828, %v2036
    %2053 = vst [vmem:[#allocation8] sm:$0xff] %v2037
    %2054 = vst [vmem:[#allocation8 + $0x8] sm:$0xff] %v2038
    %2055 = vst [vmem:[#allocation8 + $0x10] sm:$0xff] %v2039
    %2056 = vst [vmem:[#allocation8 + $0x18] sm:$0xff] %v2040
    %2057 = vst [vmem:[#allocation8 + $0x20] sm:$0xff] %v2041
    %2058 = vst [vmem:[#allocation8 + $0x28] sm:$0xff] %v2042
    %2059 = vst [vmem:[#allocation8 + $0x30] sm:$0xff] %v2043
    %2060 = vst [vmem:[#allocation8 + $0x38] sm:$0xff] %v2044
    %2061 = vst [vmem:[#allocation8 + $0x40] sm:$0xff] %v2045
    %2062 = vst [vmem:[#allocation8 + $0x48] sm:$0xff] %v2046
    %2063 = vst [vmem:[#allocation8 + $0x50] sm:$0xff] %v2047
    %2064 = vst [vmem:[#allocation8 + $0x58] sm:$0xff] %v2048
    %2065 = vst [vmem:[#allocation8 + $0x60] sm:$0xff] %v2049
    %2066 = vst [vmem:[#allocation8 + $0x68] sm:$0xff] %v2050
    %2067 = vst [vmem:[#allocation8 + $0x70] sm:$0xff] %v2051
    %2068 = vst [vmem:[#allocation8 + $0x78] sm:$0xff] %v2052
    %v2069 = vlaneseq
    %v2070 = vshrl.u32 %v2069, 7
    %v2071 = vsub.s32 %v530, %v2070
    %v2072 = vrot.slane %v1608, %v2071
    %v2073 = vlaneseq
    %v2074 = vshrl.u32 %v2073, 7
    %v2075 = vsub.s32 %v530, %v2074
    %v2076 = vrot.slane %v1613, %v2075
    %v2077 = vlaneseq
    %v2078 = vshrl.u32 %v2077, 7
    %v2079 = vsub.s32 %v530, %v2078
    %v2080 = vrot.slane %v1618, %v2079
    %v2081 = vlaneseq
    %v2082 = vshrl.u32 %v2081, 7
    %v2083 = vsub.s32 %v530, %v2082
    %v2084 = vrot.slane %v1623, %v2083
    %v2085 = vlaneseq
    %v2086 = vshrl.u32 %v2085, 7
    %v2087 = vsub.s32 %v530, %v2086
    %v2088 = vrot.slane %v1628, %v2087
    %v2089 = vlaneseq
    %v2090 = vshrl.u32 %v2089, 7
    %v2091 = vsub.s32 %v530, %v2090
    %v2092 = vrot.slane %v1633, %v2091
    %v2093 = vlaneseq
    %v2094 = vshrl.u32 %v2093, 7
    %v2095 = vsub.s32 %v530, %v2094
    %v2096 = vrot.slane %v1638, %v2095
    %v2097 = vlaneseq
    %v2098 = vshrl.u32 %v2097, 7
    %v2099 = vsub.s32 %v530, %v2098
    %v2100 = vrot.slane %v1643, %v2099
    %v2101 = vlaneseq
    %v2102 = vshrl.u32 %v2101, 7
    %v2103 = vsub.s32 %v530, %v2102
    %v2104 = vrot.slane %v1648, %v2103
    %v2105 = vlaneseq
    %v2106 = vshrl.u32 %v2105, 7
    %v2107 = vsub.s32 %v530, %v2106
    %v2108 = vrot.slane %v1653, %v2107
    %v2109 = vlaneseq
    %v2110 = vshrl.u32 %v2109, 7
    %v2111 = vsub.s32 %v530, %v2110
    %v2112 = vrot.slane %v1658, %v2111
    %v2113 = vlaneseq
    %v2114 = vshrl.u32 %v2113, 7
    %v2115 = vsub.s32 %v530, %v2114
    %v2116 = vrot.slane %v1663, %v2115
    %v2117 = vlaneseq
    %v2118 = vshrl.u32 %v2117, 7
    %v2119 = vsub.s32 %v530, %v2118
    %v2120 = vrot.slane %v1668, %v2119
    %v2121 = vlaneseq
    %v2122 = vshrl.u32 %v2121, 7
    %v2123 = vsub.s32 %v530, %v2122
    %v2124 = vrot.slane %v1673, %v2123
    %v2125 = vlaneseq
    %v2126 = vshrl.u32 %v2125, 7
    %v2127 = vsub.s32 %v530, %v2126
    %v2128 = vrot.slane %v1678, %v2127
    %v2129 = vlaneseq
    %v2130 = vshrl.u32 %v2129, 7
    %v2131 = vsub.s32 %v530, %v2130
    %v2132 = vrot.slane %v1683, %v2131
    %v2133 = vlaneseq
    %v2134 = vshrl.u32 %v2133, 7
    %v2135 = vsub.s32 %v530, %v2134
    %v2136 = vrot.slane %v1688, %v2135
    %v2137 = vlaneseq
    %v2138 = vshrl.u32 %v2137, 7
    %v2139 = vsub.s32 %v530, %v2138
    %v2140 = vrot.slane %v1693, %v2139
    %v2141 = vlaneseq
    %v2142 = vshrl.u32 %v2141, 7
    %v2143 = vsub.s32 %v530, %v2142
    %v2144 = vrot.slane %v1698, %v2143
    %v2145 = vlaneseq
    %v2146 = vshrl.u32 %v2145, 7
    %v2147 = vsub.s32 %v530, %v2146
    %v2148 = vrot.slane %v1703, %v2147
    %v2149 = vlaneseq
    %v2150 = vshrl.u32 %v2149, 7
    %v2151 = vsub.s32 %v530, %v2150
    %v2152 = vrot.slane %v1708, %v2151
    %v2153 = vlaneseq
    %v2154 = vshrl.u32 %v2153, 7
    %v2155 = vsub.s32 %v530, %v2154
    %v2156 = vrot.slane %v1713, %v2155
    %v2157 = vlaneseq
    %v2158 = vshrl.u32 %v2157, 7
    %v2159 = vsub.s32 %v530, %v2158
    %v2160 = vrot.slane %v1718, %v2159
    %v2161 = vlaneseq
    %v2162 = vshrl.u32 %v2161, 7
    %v2163 = vsub.s32 %v530, %v2162
    %v2164 = vrot.slane %v1723, %v2163
    %v2165 = vlaneseq
    %v2166 = vshrl.u32 %v2165, 7
    %v2167 = vsub.s32 %v530, %v2166
    %v2168 = vrot.slane %v1728, %v2167
    %v2169 = vlaneseq
    %v2170 = vshrl.u32 %v2169, 7
    %v2171 = vsub.s32 %v530, %v2170
    %v2172 = vrot.slane %v1733, %v2171
    %v2173 = vlaneseq
    %v2174 = vshrl.u32 %v2173, 7
    %v2175 = vsub.s32 %v530, %v2174
    %v2176 = vrot.slane %v1738, %v2175
    %v2177 = vlaneseq
    %v2178 = vshrl.u32 %v2177, 7
    %v2179 = vsub.s32 %v530, %v2178
    %v2180 = vrot.slane %v1743, %v2179
    %v2181 = vlaneseq
    %v2182 = vshrl.u32 %v2181, 7
    %v2183 = vsub.s32 %v530, %v2182
    %v2184 = vrot.slane %v1748, %v2183
    %v2185 = vlaneseq
    %v2186 = vshrl.u32 %v2185, 7
    %v2187 = vsub.s32 %v530, %v2186
    %v2188 = vrot.slane %v1753, %v2187
    %v2189 = vlaneseq
    %v2190 = vshrl.u32 %v2189, 7
    %v2191 = vsub.s32 %v530, %v2190
    %v2192 = vrot.slane %v1758, %v2191
    %v2193 = vlaneseq
    %v2194 = vshrl.u32 %v2193, 7
    %v2195 = vsub.s32 %v530, %v2194
    %v2196 = vrot.slane %v1763, %v2195
    %v2197 = vsel %vm659, %v2076, %v2072
    %v2198 = vsel %vm659, %v2084, %v2080
    %v2199 = vsel %vm659, %v2092, %v2088
    %v2200 = vsel %vm659, %v2100, %v2096
    %v2201 = vsel %vm659, %v2108, %v2104
    %v2202 = vsel %vm659, %v2116, %v2112
    %v2203 = vsel %vm659, %v2124, %v2120
    %v2204 = vsel %vm659, %v2132, %v2128
    %v2205 = vsel %vm659, %v2140, %v2136
    %v2206 = vsel %vm659, %v2148, %v2144
    %v2207 = vsel %vm659, %v2156, %v2152
    %v2208 = vsel %vm659, %v2164, %v2160
    %v2209 = vsel %vm659, %v2172, %v2168
    %v2210 = vsel %vm659, %v2180, %v2176
    %v2211 = vsel %vm659, %v2188, %v2184
    %v2212 = vsel %vm659, %v2196, %v2192
    %v2229 = vcombine.low %v2197, %v2199
    %v2231 = vunpack.c.l.s4 1983009808
    %v2232 = vunpack.c.0.s8 %v2231
    %v2233 = vlaneseq
    %v2234 = vshrl.u32 %v2233, 7
    %v2235 = vsub.s32 %v2232, %v2234
    %v2236 = vrot.slane %v2229, %v2235
    %v2237 = vcombine.low %v2198, %v2200
    %v2239 = vunpack.c.l.s4 1983009808
    %v2240 = vunpack.c.0.s8 %v2239
    %v2241 = vlaneseq
    %v2242 = vshrl.u32 %v2241, 7
    %v2243 = vsub.s32 %v2240, %v2242
    %v2244 = vrot.slane %v2237, %v2243
    %v2245 = vcombine.low %v2201, %v2203
    %v2247 = vunpack.c.l.s4 1983009808
    %v2248 = vunpack.c.0.s8 %v2247
    %v2249 = vlaneseq
    %v2250 = vshrl.u32 %v2249, 7
    %v2251 = vsub.s32 %v2248, %v2250
    %v2252 = vrot.slane %v2245, %v2251
    %v2253 = vcombine.low %v2202, %v2204
    %v2255 = vunpack.c.l.s4 1983009808
    %v2256 = vunpack.c.0.s8 %v2255
    %v2257 = vlaneseq
    %v2258 = vshrl.u32 %v2257, 7
    %v2259 = vsub.s32 %v2256, %v2258
    %v2260 = vrot.slane %v2253, %v2259
    %v2261 = vcombine.low %v2236, %v2244
    %v2263 = vunpack.c.l.s4 1934713408
    %v2264 = vunpack.c.0.s8 %v2263
    %v2265 = vlaneseq
    %v2266 = vshrl.u32 %v2265, 7
    %v2267 = vsub.s32 %v2264, %v2266
    %v2268 = vrot.slane %v2261, %v2267
    %v2269 = vcombine.low %v2252, %v2260
    %v2271 = vunpack.c.l.s4 1934713408
    %v2272 = vunpack.c.0.s8 %v2271
    %v2273 = vlaneseq
    %v2274 = vshrl.u32 %v2273, 7
    %v2275 = vsub.s32 %v2272, %v2274
    %v2276 = vrot.slane %v2269, %v2275
    %v2277 = vcombine.low %v2268, %v2276
    %v2278 = vcombine.high %v2268, %v2276
    %v2279 = vcombine.low %v2205, %v2207
    %v2281 = vunpack.c.l.s4 1983009808
    %v2282 = vunpack.c.0.s8 %v2281
    %v2283 = vlaneseq
    %v2284 = vshrl.u32 %v2283, 7
    %v2285 = vsub.s32 %v2282, %v2284
    %v2286 = vrot.slane %v2279, %v2285
    %v2287 = vcombine.low %v2206, %v2208
    %v2289 = vunpack.c.l.s4 1983009808
    %v2290 = vunpack.c.0.s8 %v2289
    %v2291 = vlaneseq
    %v2292 = vshrl.u32 %v2291, 7
    %v2293 = vsub.s32 %v2290, %v2292
    %v2294 = vrot.slane %v2287, %v2293
    %v2295 = vcombine.low %v2209, %v2211
    %v2297 = vunpack.c.l.s4 1983009808
    %v2298 = vunpack.c.0.s8 %v2297
    %v2299 = vlaneseq
    %v2300 = vshrl.u32 %v2299, 7
    %v2301 = vsub.s32 %v2298, %v2300
    %v2302 = vrot.slane %v2295, %v2301
    %v2303 = vcombine.low %v2210, %v2212
    %v2305 = vunpack.c.l.s4 1983009808
    %v2306 = vunpack.c.0.s8 %v2305
    %v2307 = vlaneseq
    %v2308 = vshrl.u32 %v2307, 7
    %v2309 = vsub.s32 %v2306, %v2308
    %v2310 = vrot.slane %v2303, %v2309
    %v2311 = vcombine.low %v2286, %v2294
    %v2313 = vunpack.c.l.s4 1934713408
    %v2314 = vunpack.c.0.s8 %v2313
    %v2315 = vlaneseq
    %v2316 = vshrl.u32 %v2315, 7
    %v2317 = vsub.s32 %v2314, %v2316
    %v2318 = vrot.slane %v2311, %v2317
    %v2319 = vcombine.low %v2302, %v2310
    %v2321 = vunpack.c.l.s4 1934713408
    %v2322 = vunpack.c.0.s8 %v2321
    %v2323 = vlaneseq
    %v2324 = vshrl.u32 %v2323, 7
    %v2325 = vsub.s32 %v2322, %v2324
    %v2326 = vrot.slane %v2319, %v2325
    %v2327 = vcombine.low %v2318, %v2326
    %v2328 = vcombine.high %v2318, %v2326
    %2331 = vrot.lane.b32.xlu0 %v2278, 8
    %v2332 = vpop.permute.xlu0 %2331
    %2333 = vrot.lane.b32.xlu0 %v2328, 8
    %v2334 = vpop.permute.xlu0 %2333
    %vm2337 = vcmask 64512
    %v2338 = vsel %vm2337, %v2277, %v2332
    %v2339 = vsel %vm2337, %v2327, %v2334
    %2340 = vxpose.xlu0.b32.start [1/16] %v2338, 128
    %2341 = vxpose.xlu0.b32.cont [2/16] %v2339, 128
    %2342 = vxpose.xlu0.b32.cont [3/16] 0.0, 128
    %2343 = vxpose.xlu0.b32.cont [4/16] 0.0, 128
    %2344 = vxpose.xlu0.b32.cont [5/16] 0.0, 128
    %2345 = vxpose.xlu0.b32.cont [6/16] 0.0, 128
    %2346 = vxpose.xlu0.b32.cont [7/16] 0.0, 128
    %2347 = vxpose.xlu0.b32.cont [8/16] 0.0, 128
    %2348 = vxpose.xlu0.b32.cont [9/16] 0.0, 128
    %2349 = vxpose.xlu0.b32.cont [10/16] 0.0, 128
    %2350 = vxpose.xlu0.b32.cont [11/16] 0.0, 128
    %2351 = vxpose.xlu0.b32.cont [12/16] 0.0, 128
    %2352 = vxpose.xlu0.b32.cont [13/16] 0.0, 128
    %2353 = vxpose.xlu0.b32.cont [14/16] 0.0, 128
    %2354 = vxpose.xlu0.b32.cont [15/16] 0.0, 128
    %2355 = vxpose.xlu0.b32.end [16/16] 0.0, 128
    %v2356 = vpop.trf.xlu0
    %v2357 = vpop.trf.xlu0
    %v2358 = vpop.trf.xlu0
    %v2359 = vpop.trf.xlu0
    %v2360 = vpop.trf.xlu0
    %v2361 = vpop.trf.xlu0
    %v2362 = vpop.trf.xlu0
    %v2363 = vpop.trf.xlu0
    %v2364 = vpop.trf.xlu0
    %v2365 = vpop.trf.xlu0
    %v2366 = vpop.trf.xlu0
    %v2367 = vpop.trf.xlu0
    %v2368 = vpop.trf.xlu0
    %v2369 = vpop.trf.xlu0
    %v2370 = vpop.trf.xlu0
    %v2371 = vpop.trf.xlu0
    %vm2372 = vcmask 130048
    %2373 = vst.msk [vmem:[#allocation9] sm:$0xff] %vm2372, %v2356
    %2374 = vst.msk [vmem:[#allocation9 + $0x8] sm:$0xff] %vm2372, %v2357
    // Predicated region
    $region30: #{tpu_custom_call.1} parent=1 // pred_check
      _
    $region31: #{tpu_custom_call.1} parent=1 // pred_check_branch
      %2376 = sbr.rel (0) target = $region33
    $region32: #{tpu_custom_call.1} parent=1 // pred_region
      %s2378 = ssub.s32 2048, 2048
      %2379 = vsyncadd [#allocation4], %s2378
      %s2380 = sshll.u32 [#allocation8], 4
      %s2381 = int_to_ptr.vmem [resolvable:$true] %s2380
      %2386 = dma.vmem_to_hbm [thread:$0]  %s2381, 2048, %s4, [#allocation4], 128, 128, 8
    $region33: #{tpu_custom_call.1} parent=1 // pred_fallthru
      _
    // Predicated region
    $region34: #{tpu_custom_call.1} parent=1 // pred_check
      _
    $region35: #{tpu_custom_call.1} parent=1 // pred_check_branch
      %2388 = sbr.rel (0) target = $region37
    $region36: #{tpu_custom_call.1} parent=1 // pred_region
      %s2390 = ssub.s32 256, 256
      %2391 = vsyncadd [#allocation10], %s2390
      %s2392 = sshll.u32 [#allocation9], 4
      %s2393 = int_to_ptr.vmem [resolvable:$true] %s2392
      %2398 = dma.vmem_to_hbm [thread:$0]  %s2393, 256, %s5, [#allocation10], 128, 128, 8
    $region37: #{tpu_custom_call.1} parent=1 // pred_fallthru
      _
    // Predicated region
    $region38: #{tpu_custom_call.1} parent=1 // pred_check
      _
    $region39: #{tpu_custom_call.1} parent=1 // pred_check_branch
      %2400 = sbr.rel (0) target = $region41
    $region40: #{tpu_custom_call.1} parent=1 // pred_region
      %2401 = dma.done [#allocation4], 2048
    $region41: #{tpu_custom_call.1} parent=1 // pred_fallthru
      _
    // Predicated region
    $region42: #{tpu_custom_call.1} parent=1 // pred_check
      _
    $region43: #{tpu_custom_call.1} parent=1 // pred_check_branch
      %2403 = sbr.rel (0) target = $region45
    $region44: #{tpu_custom_call.1} parent=1 // pred_region
      %2404 = dma.done [#allocation10], 256
    $region45: #{tpu_custom_call.1} parent=1 // pred_fallthru
      _
    %2405 = vsyncpa [#allocation3], 1
    %2406 = vsyncpa [#allocation6], 1
    %2407 = vsyncpa [#allocation4], 1
    %2408 = vsyncpa [#allocation10], 1

</llo_original>
